<compile_context>
chip_gen: v7x
topology: tpu7x:2x2x1
jax: 0.10.0
libtpu: 0.0.40
codegen_flags: <defaults>
</compile_context>

<pallas_src>
import math
import functools

import jax
import jax.numpy as jnp
from jax.experimental import pallas as pl
from jax.experimental.pallas import tpu as pltpu


def _round_up(n, m):
    return ((n + m - 1) // m) * m


# ----------------------------- Pallas kernel --------------------------------
def _vae_kernel(common_size, total_size, total_pad, log_sigma_q,
                x_ref, eps_ref,
                we1_ref, be1_ref,
                wh_ref, bh_ref,
                wc_ref, bc_ref,
                wd1_ref, bd1_ref,
                wd2_ref, bd2_ref,
                recon_ref, slab_ref):
    x = x_ref[...]        # [BM, DIN_PAD]   bf16
    eps = eps_ref[...]    # [BM, TOTAL_PAD] f32 (noise; y packed in last lane)
    # labels (0.0 / 1.0) live in the otherwise-unused padded lane TOTAL_PAD-1
    y = eps[:, total_pad - 1:total_pad]            # [BM, 1]

    # -------- Encoder: shared hidden layer (bf16 MXU, f32 accumulation) -----
    h = jnp.dot(x, we1_ref[...], preferred_element_type=jnp.float32) + be1_ref[...]
    h = jnp.maximum(h, 0.0)

    # -------- fused [mean | logvar] heads: a single lane-padded matmul ------
    heads = jnp.dot(h.astype(jnp.bfloat16), wh_ref[...],
                    preferred_element_type=jnp.float32) + bh_ref[...]
    mean = heads[:, :total_pad]          # 128-lane aligned split
    logvar = heads[:, total_pad:]

    bm = mean.shape[0]
    col = jax.lax.broadcasted_iota(jnp.int32, (bm, total_pad), 1)
    sal_cols = jnp.logical_and(col >= common_size, col < total_size)
    override = jnp.logical_and(sal_cols, y == 0.0)        # [BM, TOTAL_PAD]

    # specific_logvar_qzx[y == 0] = log(sigma_q)   (before sampling, as in ref)
    logvar = jnp.where(override, jnp.float32(log_sigma_q), logvar)

    # mean is final: store it immediately (lane-aligned slice view, no concat)
    slab_ref[:, 0:total_pad] = mean

    # -------- reparameterization --------
    std = jnp.exp(logvar * 0.5)
    z = mean + std * eps
    slab_ref[:, 2 * total_pad:3 * total_pad] = z

    # -------- classifier on z[:, common:]:
    # full-width masked reduce (wc is zero on background/padding columns)
    # instead of an unaligned lane slice at column `common_size`.
    logits = jnp.sum(z * wc_ref[...], axis=-1, keepdims=True) + bc_ref[...]
    ypred = jax.nn.sigmoid(logits)

    # pack y_pred into the unused padded lane of the logvar quarter and store
    # the whole 128-lane quarter unmasked (no separate narrow output).
    logvar_q = jnp.where(col == total_pad - 1, ypred, logvar)
    slab_ref[:, total_pad:2 * total_pad] = logvar_q

    # -------- zero salient latents where y == 0, then decode --------
    z_zeroed = jnp.where(override, 0.0, z)
    hd = jnp.dot(z_zeroed.astype(jnp.bfloat16), wd1_ref[...],
                 preferred_element_type=jnp.float32) + bd1_ref[...]
    hd = jnp.maximum(hd, 0.0)
    recon = jax.nn.sigmoid(
        jnp.dot(hd.astype(jnp.bfloat16), wd2_ref[...],
                preferred_element_type=jnp.float32) + bd2_ref[...])

    # recon is the dominant output -> bf16 writeback (halves HBM store bytes)
    recon_ref[...] = recon.astype(jnp.bfloat16)


# ----------------------- host-side weight preparation -----------------------
def _prepare_kernel_params(params, hidden, din_pad, hidden_pad,
                           background, salient, total, total_pad):
    f32, bf16 = jnp.float32, jnp.bfloat16

    def pad2(a, rows, cols, dtype):
        out = jnp.zeros((rows, cols), dtype)
        return out.at[:a.shape[0], :a.shape[1]].set(a.astype(dtype))

    we1 = pad2(params["we1"], din_pad, hidden_pad, bf16)
    be1 = pad2(params["be1"], 1, hidden_pad, f32)

    # fused encoder heads: [mean | logvar], each lane-padded to total_pad
    wh = jnp.zeros((hidden_pad, 2 * total_pad), bf16)
    wh = wh.at[:hidden, :total].set(params["wm"].astype(bf16))
    wh = wh.at[:hidden, total_pad:total_pad + total].set(params["wlv"].astype(bf16))
    bh = jnp.zeros((1, 2 * total_pad), f32)
    bh = bh.at[:, :total].set(params["bm"].astype(f32))
    bh = bh.at[:, total_pad:total_pad + total].set(params["blv"].astype(f32))

    # classifier weight masked to full latent width (zeros elsewhere)
    wc = jnp.zeros((1, total_pad), f32)
    wc = wc.at[0, background:background + salient].set(params["wc"].astype(f32))
    bc = params["bc"].reshape(1, 1).astype(f32)

    wd1 = pad2(params["wd1"], total_pad, hidden_pad, bf16)
    bd1 = pad2(params["bd1"], 1, hidden_pad, f32)
    wd2 = pad2(params["wd2"], hidden_pad, din_pad, bf16)
    bd2 = pad2(params["bd2"], 1, din_pad, f32)

    return (we1, be1, wh, bh, wc, bc, wd1, bd1, wd2, bd2)


# ----------------------------- host wrapper ---------------------------------
def shallow_dis_vae_forward(x, y, eps, params,
                            background_latent_size, salient_latent_size,
                            sigma_q=0.1):
    """x: [B, C, H, W] f32, y: [B] f32 (0/1), eps: [B, total] f32 noise."""
    B = x.shape[0]
    din = int(x.shape[1] * x.shape[2] * x.shape[3])
    total = background_latent_size + salient_latent_size
    hidden = params["we1"].shape[1]

    TOTAL_PAD = 128
    # need a spare lane for the packed y label / y_pred output
    assert total < TOTAL_PAD
    DIN_PAD = _round_up(din, 128)
    HIDDEN_PAD = _round_up(hidden, 128)

    # Batch tiling: aim for >=2 (ideally ~4) grid steps so v7x's two
    # TensorCores both get work and DMA pipelines against compute; cap BM at
    # 512 (big row tiles amortize per-step overhead on v5e/v6e's 128 MiB VMEM).
    TARGET_STEPS = 4
    BM = min(512, max(8, _round_up(pl.cdiv(B, TARGET_STEPS), 8)))
    B_pad = _round_up(B, BM)
    grid = (B_pad // BM,)

    # Inputs: flatten+cast first, then a single jnp.pad (no extra f32 copy).
    x_p = jnp.pad(x.reshape(B, din).astype(jnp.bfloat16),
                  ((0, B_pad - B), (0, DIN_PAD - din)))
    # eps padded to TOTAL_PAD-1 lanes; the y labels ride in the last lane, so
    # there is no separate width-1 y input stream.
    eps_pad = jnp.pad(eps.astype(jnp.float32),
                      ((0, 0), (0, TOTAL_PAD - 1 - total)))
    eps_y = jnp.concatenate(
        [eps_pad, y.astype(jnp.float32).reshape(B, 1)], axis=1)
    eps_p = jnp.pad(eps_y, ((0, B_pad - B), (0, 0)))
    # TODO(synk): optionally generate eps in-kernel with pltpu.prng_seed +
    # pltpu.stateful_normal to drop this HBM input (kept host-side here for
    # deterministic verification against the pure-JAX reference).

    weights = _prepare_kernel_params(
        params, hidden, DIN_PAD, HIDDEN_PAD,
        background_latent_size, salient_latent_size, total, TOTAL_PAD)

    kernel = functools.partial(_vae_kernel, background_latent_size, total,
                               TOTAL_PAD, float(math.log(sigma_q)))

    row_specs = [
        pl.BlockSpec((BM, DIN_PAD), lambda i: (i, 0)),     # x
        pl.BlockSpec((BM, TOTAL_PAD), lambda i: (i, 0)),   # eps (+ y lane)
    ]
    # Constant index_map -> weights stay VMEM-resident across grid steps.
    # TODO(synk): on production-scale din, single-buffer these constant
    # weights (pipeline_mode) and tile din as a K-reduction / N-tiling so
    # we1/wd2 need not be fully VMEM-resident (mandatory on v7x's 64 MiB VMEM).
    weight_specs = [pl.BlockSpec(w.shape, lambda i: (0, 0)) for w in weights]

    out_shape = (
        jax.ShapeDtypeStruct((B_pad, DIN_PAD), jnp.bfloat16),       # recon (flat)
        jax.ShapeDtypeStruct((B_pad, 3 * TOTAL_PAD), jnp.float32),  # mean|logvar(+ypred)|z
    )
    out_specs = (
        pl.BlockSpec((BM, DIN_PAD), lambda i: (i, 0)),
        pl.BlockSpec((BM, 3 * TOTAL_PAD), lambda i: (i, 0)),
    )

    recon_p, slab = pl.pallas_call(
        kernel,
        grid=grid,
        in_specs=row_specs + weight_specs,
        out_specs=out_specs,
        out_shape=out_shape,
        compiler_params=pltpu.CompilerParams(
            dimension_semantics=("parallel",),
            vmem_limit_bytes=(64 if BM >= 512 else 32) * 1024 * 1024),
    )(x_p, eps_p, *weights)

    reconstructed_x = recon_p[:B, :din].astype(jnp.float32).reshape(x.shape)
    mean = slab[:B, 0:total]
    logvar = slab[:B, TOTAL_PAD:TOTAL_PAD + total]
    z = slab[:B, 2 * TOTAL_PAD:2 * TOTAL_PAD + total]
    y_pred = slab[:B, 2 * TOTAL_PAD - 1:2 * TOTAL_PAD]   # packed padded lane
    return reconstructed_x, mean, logvar, y_pred, z


# ----------------------------- parameter init -------------------------------
def init_params(key, din, hidden, background, salient):
    total = background + salient
    ks = jax.random.split(key, 8)
    s = 0.02

    def n(k, shape):
        return (s * jax.random.normal(k, shape)).astype(jnp.float32)

    # encoder: shared hidden + heads (head weights stored already concatenated
    # as [background | salient], matching the forward's torch.cat ordering)
    we1 = n(ks[0], (din, hidden));  be1 = jnp.zeros((1, hidden), jnp.float32)
    wm = n(ks[1], (hidden, total)); bm = jnp.zeros((1, total), jnp.float32)
    wlv = n(ks[2], (hidden, total)); blv = jnp.zeros((1, total), jnp.float32)
    # classifier: Linear(salient, 1) + sigmoid
    wc = n(ks[3], (salient,));      bc = jnp.zeros((1, 1), jnp.float32)
    # decoder: Linear(total, hidden) + ReLU, Linear(hidden, din) + sigmoid
    wd1 = n(ks[4], (total, hidden)); bd1 = jnp.zeros((1, hidden), jnp.float32)
    wd2 = n(ks[5], (hidden, din));  bd2 = jnp.zeros((1, din), jnp.float32)

    return dict(we1=we1, be1=be1, wm=wm, bm=bm, wlv=wlv, blv=blv,
                wc=wc, bc=bc, wd1=wd1, bd1=bd1, wd2=wd2, bd2=bd2)


# ------------------------- pure-JAX reference (f32) --------------------------
def reference_forward(x, y, eps, p, background, salient, sigma_q):
    B = x.shape[0]
    xf = x.reshape(B, -1).astype(jnp.float32)
    h = jnp.maximum(xf @ p["we1"] + p["be1"], 0.0)
    mean = h @ p["wm"] + p["bm"]
    logvar = h @ p["wlv"] + p["blv"]
    total = background + salient
    col = jnp.arange(total)[None, :]
    override = (col >= background) & (y[:, None] == 0.0)
    logvar = jnp.where(override, jnp.log(sigma_q), logvar)
    std = jnp.exp(0.5 * logvar)
    z = mean + std * eps
    logits = jnp.sum(z[:, background:] * p["wc"][None, :],
                     axis=-1, keepdims=True) + p["bc"]
    y_pred = jax.nn.sigmoid(logits)
    z_zeroed = jnp.where(override, 0.0, z)
    hd = jnp.maximum(z_zeroed @ p["wd1"] + p["bd1"], 0.0)
    recon = jax.nn.sigmoid(hd @ p["wd2"] + p["bd2"])
    return recon.reshape(x.shape), mean, logvar, y_pred, z


# --------------------------------- main --------------------------------------
if __name__ == "__main__":
    # Small shapes: batch=2, channels=4, spatial=16x16 -> Din = 1024
    B, C, H, W = 2, 4, 16, 16
    background_latent_size = 8
    salient_latent_size = 4
    hidden = 32
    sigma_q = 0.1
    total = background_latent_size + salient_latent_size
    din = C * H * W

    key = jax.random.PRNGKey(0)
    k_x, k_eps, k_p = jax.random.split(key, 3)

    x = jax.random.uniform(k_x, (B, C, H, W), dtype=jnp.float32)
    y = jnp.array([0.0, 1.0], dtype=jnp.float32)          # label 0 and label 1
    # torch.randn(...) inside forward -> deterministic host-side noise input
    eps = jax.random.normal(k_eps, (B, total), dtype=jnp.float32)

    params = init_params(k_p, din, hidden,
                         background_latent_size, salient_latent_size)

    outs = shallow_dis_vae_forward(
        x, y, eps, params,
        background_latent_size, salient_latent_size, sigma_q)
    outs = jax.block_until_ready(outs)

    reconstructed_x, mean, logvar, y_pred, z = outs
    assert reconstructed_x.shape == (B, C, H, W)
    assert mean.shape == (B, total)
    assert logvar.shape == (B, total)
    assert y_pred.shape == (B, 1)
    assert z.shape == (B, total)
    # sample with y == 0 must have salient logvar forced to log(sigma_q)
    assert jnp.allclose(logvar[0, background_latent_size:],
                        math.log(sigma_q), atol=1e-5)

    # numeric check vs. pure-JAX f32 reference (bf16 matmul/recon tolerance)
    ref = reference_forward(x, y, eps, params,
                            background_latent_size, salient_latent_size, sigma_q)
    for got, want in zip(outs, ref):
        err = float(jnp.max(jnp.abs(got - want)))
        assert err < 2e-2, f"max abs error {err}"

    print("KERNEL_OK")
</pallas_src>

<mosaic_0001>
module attributes {stable_mosaic.version = 11 : i64} {
  func.func @_vae_kernel(%arg0: i32, %arg1: memref<8x1024xbf16, #tpu.memory_space<vmem>>, %arg2: memref<8x128xf32, #tpu.memory_space<vmem>>, %arg3: memref<1024x128xbf16, #tpu.memory_space<vmem>>, %arg4: memref<1x128xf32, #tpu.memory_space<vmem>>, %arg5: memref<128x256xbf16, #tpu.memory_space<vmem>>, %arg6: memref<1x256xf32, #tpu.memory_space<vmem>>, %arg7: memref<1x128xf32, #tpu.memory_space<vmem>>, %arg8: memref<1x1xf32, #tpu.memory_space<vmem>>, %arg9: memref<128x128xbf16, #tpu.memory_space<vmem>>, %arg10: memref<1x128xf32, #tpu.memory_space<vmem>>, %arg11: memref<128x1024xbf16, #tpu.memory_space<vmem>>, %arg12: memref<1x1024xf32, #tpu.memory_space<vmem>>, %arg13: memref<8x1024xbf16, #tpu.memory_space<vmem>>, %arg14: memref<8x384xf32, #tpu.memory_space<vmem>>) attributes {dimension_semantics = [#tpu.dimension_semantics<parallel>], iteration_bounds = array<i64: 1>, scalar_prefetch = 0 : i64, scratch_operands = 0 : i64, tpu.core_type = #tpu.core_type<tc>, window_params = [{transform_indices = @transform_0, window_bounds = array<i64: 8, 1024>}, {transform_indices = @transform_1, window_bounds = array<i64: 8, 128>}, {pipeline_mode = #tpu.pipeline_mode<synchronous>, transform_indices = @transform_2, window_bounds = array<i64: 1024, 128>}, {pipeline_mode = #tpu.pipeline_mode<synchronous>, transform_indices = @transform_3, window_bounds = array<i64: 1, 128>}, {pipeline_mode = #tpu.pipeline_mode<synchronous>, transform_indices = @transform_4, window_bounds = array<i64: 128, 256>}, {pipeline_mode = #tpu.pipeline_mode<synchronous>, transform_indices = @transform_5, window_bounds = array<i64: 1, 256>}, {pipeline_mode = #tpu.pipeline_mode<synchronous>, transform_indices = @transform_6, window_bounds = array<i64: 1, 128>}, {pipeline_mode = #tpu.pipeline_mode<synchronous>, transform_indices = @transform_7, window_bounds = array<i64: 1, 1>}, {pipeline_mode = #tpu.pipeline_mode<synchronous>, transform_indices = @transform_8, window_bounds = array<i64: 128, 128>}, {pipeline_mode = #tpu.pipeline_mode<synchronous>, transform_indices = @transform_9, window_bounds = array<i64: 1, 128>}, {pipeline_mode = #tpu.pipeline_mode<synchronous>, transform_indices = @transform_10, window_bounds = array<i64: 128, 1024>}, {pipeline_mode = #tpu.pipeline_mode<synchronous>, transform_indices = @transform_11, window_bounds = array<i64: 1, 1024>}, {transform_indices = @transform_12, window_bounds = array<i64: 8, 1024>}, {transform_indices = @transform_13, window_bounds = array<i64: 8, 384>}]} {
    %c0 = arith.constant 0 : index
    %c0_0 = arith.constant 0 : index
    %0 = vector.load %arg1[%c0, %c0_0] : memref<8x1024xbf16, #tpu.memory_space<vmem>>, vector<8x1024xbf16>
    %c0_1 = arith.constant 0 : index
    %c0_2 = arith.constant 0 : index
    %1 = vector.load %arg2[%c0_1, %c0_2] : memref<8x128xf32, #tpu.memory_space<vmem>>, vector<8x128xf32>
    %2 = vector.extract_strided_slice %1 {offsets = [0, 127], sizes = [8, 1], strides = [1, 1]} : vector<8x128xf32> to vector<8x1xf32>
    %c0_3 = arith.constant 0 : index
    %c0_4 = arith.constant 0 : index
    %3 = vector.load %arg3[%c0_3, %c0_4] : memref<1024x128xbf16, #tpu.memory_space<vmem>>, vector<1024x128xbf16>
    %cst = arith.constant dense<0.000000e+00> : vector<8x128xf32>
    %4 = tpu.matmul %0, %3, %cst {dimension_numbers = #tpu.dot_dimension_numbers<[1], [0], [0], [1], [0, 0, 1, 1], [], []>} : vector<8x1024xbf16>, vector<1024x128xbf16>, vector<8x128xf32> -> vector<8x128xf32>
    %c0_5 = arith.constant 0 : index
    %c0_6 = arith.constant 0 : index
    %5 = vector.load %arg4[%c0_5, %c0_6] : memref<1x128xf32, #tpu.memory_space<vmem>>, vector<1x128xf32>
    %6 = vector.broadcast %5 : vector<1x128xf32> to vector<8x128xf32>
    %7 = arith.addf %4, %6 : vector<8x128xf32>
    %cst_7 = arith.constant 0.000000e+00 : f32
    %8 = vector.broadcast %cst_7 : f32 to vector<8x128xf32>
    %9 = arith.maximumf %7, %8 : vector<8x128xf32>
    %10 = arith.truncf %9 : vector<8x128xf32> to vector<8x128xbf16>
    %c0_8 = arith.constant 0 : index
    %c0_9 = arith.constant 0 : index
    %11 = vector.load %arg5[%c0_8, %c0_9] : memref<128x256xbf16, #tpu.memory_space<vmem>>, vector<128x256xbf16>
    %cst_10 = arith.constant dense<0.000000e+00> : vector<8x256xf32>
    %12 = tpu.matmul %10, %11, %cst_10 {dimension_numbers = #tpu.dot_dimension_numbers<[1], [0], [0], [1], [0, 0, 1, 1], [], []>} : vector<8x128xbf16>, vector<128x256xbf16>, vector<8x256xf32> -> vector<8x256xf32>
    %c0_11 = arith.constant 0 : index
    %c0_12 = arith.constant 0 : index
    %13 = vector.load %arg6[%c0_11, %c0_12] : memref<1x256xf32, #tpu.memory_space<vmem>>, vector<1x256xf32>
    %14 = vector.broadcast %13 : vector<1x256xf32> to vector<8x256xf32>
    %15 = arith.addf %12, %14 : vector<8x256xf32>
    %16 = vector.extract_strided_slice %15 {offsets = [0, 0], sizes = [8, 128], strides = [1, 1]} : vector<8x256xf32> to vector<8x128xf32>
    %17 = vector.extract_strided_slice %15 {offsets = [0, 128], sizes = [8, 128], strides = [1, 1]} : vector<8x256xf32> to vector<8x128xf32>
    %18 = tpu.iota {dimensions = array<i32: 1>} : vector<8x128xi32>
    %c8_i32 = arith.constant 8 : i32
    %19 = vector.broadcast %c8_i32 : i32 to vector<8x128xi32>
    %20 = arith.cmpi sge, %18, %19 : vector<8x128xi32>
    %c12_i32 = arith.constant 12 : i32
    %21 = vector.broadcast %c12_i32 : i32 to vector<8x128xi32>
    %22 = arith.cmpi slt, %18, %21 : vector<8x128xi32>
    %23 = arith.andi %20, %22 : vector<8x128xi1>
    %cst_13 = arith.constant 0.000000e+00 : f32
    %24 = vector.broadcast %cst_13 : f32 to vector<8x1xf32>
    %25 = arith.cmpf oeq, %2, %24 : vector<8x1xf32>
    %26 = vector.broadcast %25 : vector<8x1xi1> to vector<8x128xi1>
    %27 = arith.andi %23, %26 : vector<8x128xi1>
    %cst_14 = arith.constant -2.30258512 : f32
    %28 = vector.broadcast %cst_14 : f32 to vector<8x128xf32>
    %29 = arith.select %27, %28, %17 : vector<8x128xi1>, vector<8x128xf32>
    %c0_15 = arith.constant 0 : index
    %c0_16 = arith.constant 0 : index
    %30 = vector.load %arg14[%c0_15, %c0_16] : memref<8x384xf32, #tpu.memory_space<vmem>>, vector<8x128xf32>
    tpu.vector_store %arg14[%c0_15, %c0_16], %16 {strides = array<i32>} : memref<8x384xf32, #tpu.memory_space<vmem>>, vector<8x128xf32>,
    %cst_17 = arith.constant 5.000000e-01 : f32
    %31 = vector.broadcast %cst_17 : f32 to vector<8x128xf32>
    %32 = arith.mulf %29, %31 : vector<8x128xf32>
    %33 = math.exp %32 : vector<8x128xf32>
    %34 = arith.mulf %33, %1 : vector<8x128xf32>
    %35 = arith.addf %16, %34 : vector<8x128xf32>
    %c0_18 = arith.constant 0 : index
    %c256 = arith.constant 256 : index
    %36 = vector.load %arg14[%c0_18, %c256] : memref<8x384xf32, #tpu.memory_space<vmem>>, vector<8x128xf32>
    tpu.vector_store %arg14[%c0_18, %c256], %35 {strides = array<i32>} : memref<8x384xf32, #tpu.memory_space<vmem>>, vector<8x128xf32>,
    %c0_19 = arith.constant 0 : index
    %c0_20 = arith.constant 0 : index
    %37 = vector.load %arg7[%c0_19, %c0_20] : memref<1x128xf32, #tpu.memory_space<vmem>>, vector<1x128xf32>
    %38 = vector.broadcast %37 : vector<1x128xf32> to vector<8x128xf32>
    %39 = arith.mulf %35, %38 : vector<8x128xf32>
    %cst_21 = arith.constant dense<0.000000e+00> : vector<8xf32>
    %40 = vector.multi_reduction <add>, %39, %cst_21 [1] : vector<8x128xf32> to vector<8xf32>
    %41 = vector.shape_cast %40 : vector<8xf32> to vector<8x1xf32>
    %c0_22 = arith.constant 0 : index
    %c0_23 = arith.constant 0 : index
    %42 = vector.load %arg8[%c0_22, %c0_23] : memref<1x1xf32, #tpu.memory_space<vmem>>, vector<1x1xf32>
    %43 = vector.broadcast %42 : vector<1x1xf32> to vector<8x1xf32>
    %44 = arith.addf %41, %43 : vector<8x1xf32>
    %45 = arith.negf %44 : vector<8x1xf32>
    %46 = math.exp %45 : vector<8x1xf32>
    %cst_24 = arith.constant 1.000000e+00 : f32
    %47 = vector.broadcast %cst_24 : f32 to vector<8x1xf32>
    %48 = arith.addf %47, %46 : vector<8x1xf32>
    %49 = arith.divf %47, %48 : vector<8x1xf32>
    %c127_i32 = arith.constant 127 : i32
    %50 = vector.broadcast %c127_i32 : i32 to vector<8x128xi32>
    %51 = arith.cmpi eq, %18, %50 : vector<8x128xi32>
    %52 = vector.shape_cast %49 : vector<8x1xf32> to vector<8x1xf32>
    %53 = vector.broadcast %52 : vector<8x1xf32> to vector<8x128xf32>
    %54 = arith.select %51, %53, %29 : vector<8x128xi1>, vector<8x128xf32>
    %c0_25 = arith.constant 0 : index
    %c128 = arith.constant 128 : index
    %55 = vector.load %arg14[%c0_25, %c128] : memref<8x384xf32, #tpu.memory_space<vmem>>, vector<8x128xf32>
    tpu.vector_store %arg14[%c0_25, %c128], %54 {strides = array<i32>} : memref<8x384xf32, #tpu.memory_space<vmem>>, vector<8x128xf32>,
    %cst_26 = arith.constant 0.000000e+00 : f32
    %56 = vector.broadcast %cst_26 : f32 to vector<8x128xf32>
    %57 = arith.select %27, %56, %35 : vector<8x128xi1>, vector<8x128xf32>
    %58 = arith.truncf %57 : vector<8x128xf32> to vector<8x128xbf16>
    %c0_27 = arith.constant 0 : index
    %c0_28 = arith.constant 0 : index
    %59 = vector.load %arg9[%c0_27, %c0_28] : memref<128x128xbf16, #tpu.memory_space<vmem>>, vector<128x128xbf16>
    %cst_29 = arith.constant dense<0.000000e+00> : vector<8x128xf32>
    %60 = tpu.matmul %58, %59, %cst_29 {dimension_numbers = #tpu.dot_dimension_numbers<[1], [0], [0], [1], [0, 0, 1, 1], [], []>} : vector<8x128xbf16>, vector<128x128xbf16>, vector<8x128xf32> -> vector<8x128xf32>
    %c0_30 = arith.constant 0 : index
    %c0_31 = arith.constant 0 : index
    %61 = vector.load %arg10[%c0_30, %c0_31] : memref<1x128xf32, #tpu.memory_space<vmem>>, vector<1x128xf32>
    %62 = vector.broadcast %61 : vector<1x128xf32> to vector<8x128xf32>
    %63 = arith.addf %60, %62 : vector<8x128xf32>
    %cst_32 = arith.constant 0.000000e+00 : f32
    %64 = vector.broadcast %cst_32 : f32 to vector<8x128xf32>
    %65 = arith.maximumf %63, %64 : vector<8x128xf32>
    %66 = arith.truncf %65 : vector<8x128xf32> to vector<8x128xbf16>
    %c0_33 = arith.constant 0 : index
    %c0_34 = arith.constant 0 : index
    %67 = vector.load %arg11[%c0_33, %c0_34] : memref<128x1024xbf16, #tpu.memory_space<vmem>>, vector<128x1024xbf16>
    %cst_35 = arith.constant dense<0.000000e+00> : vector<8x1024xf32>
    %68 = tpu.matmul %66, %67, %cst_35 {dimension_numbers = #tpu.dot_dimension_numbers<[1], [0], [0], [1], [0, 0, 1, 1], [], []>} : vector<8x128xbf16>, vector<128x1024xbf16>, vector<8x1024xf32> -> vector<8x1024xf32>
    %c0_36 = arith.constant 0 : index
    %c0_37 = arith.constant 0 : index
    %69 = vector.load %arg12[%c0_36, %c0_37] : memref<1x1024xf32, #tpu.memory_space<vmem>>, vector<1x1024xf32>
    %70 = vector.broadcast %69 : vector<1x1024xf32> to vector<8x1024xf32>
    %71 = arith.addf %68, %70 : vector<8x1024xf32>
    %72 = arith.negf %71 : vector<8x1024xf32>
    %73 = math.exp %72 : vector<8x1024xf32>
    %cst_38 = arith.constant 1.000000e+00 : f32
    %74 = vector.broadcast %cst_38 : f32 to vector<8x1024xf32>
    %75 = arith.addf %74, %73 : vector<8x1024xf32>
    %76 = arith.divf %74, %75 : vector<8x1024xf32>
    %77 = arith.truncf %76 : vector<8x1024xf32> to vector<8x1024xbf16>
    %c0_39 = arith.constant 0 : index
    %c0_40 = arith.constant 0 : index
    %78 = vector.load %arg13[%c0_39, %c0_40] : memref<8x1024xbf16, #tpu.memory_space<vmem>>, vector<8x1024xbf16>
    tpu.vector_store %arg13[%c0_39, %c0_40], %77 {strides = array<i32>} : memref<8x1024xbf16, #tpu.memory_space<vmem>>, vector<8x1024xbf16>,
    return
  }
  func.func @transform_0(%arg0: i32) -> (i32, i32) {
    %c0_i32 = arith.constant 0 : i32
    %c0_i32_0 = arith.constant 0 : i32
    return %arg0, %c0_i32 : i32, i32
  }
  func.func @transform_1(%arg0: i32) -> (i32, i32) {
    %c0_i32 = arith.constant 0 : i32
    %c0_i32_0 = arith.constant 0 : i32
    return %arg0, %c0_i32 : i32, i32
  }
  func.func @transform_2(%arg0: i32) -> (i32, i32) {
    %c0_i32 = arith.constant 0 : i32
    %c0_i32_0 = arith.constant 0 : i32
    %c0_i32_1 = arith.constant 0 : i32
    return %c0_i32, %c0_i32_0 : i32, i32
  }
  func.func @transform_3(%arg0: i32) -> (i32, i32) {
    %c0_i32 = arith.constant 0 : i32
    %c0_i32_0 = arith.constant 0 : i32
    %c0_i32_1 = arith.constant 0 : i32
    return %c0_i32, %c0_i32_0 : i32, i32
  }
  func.func @transform_4(%arg0: i32) -> (i32, i32) {
    %c0_i32 = arith.constant 0 : i32
    %c0_i32_0 = arith.constant 0 : i32
    %c0_i32_1 = arith.constant 0 : i32
    return %c0_i32, %c0_i32_0 : i32, i32
  }
  func.func @transform_5(%arg0: i32) -> (i32, i32) {
    %c0_i32 = arith.constant 0 : i32
    %c0_i32_0 = arith.constant 0 : i32
    %c0_i32_1 = arith.constant 0 : i32
    return %c0_i32, %c0_i32_0 : i32, i32
  }
  func.func @transform_6(%arg0: i32) -> (i32, i32) {
    %c0_i32 = arith.constant 0 : i32
    %c0_i32_0 = arith.constant 0 : i32
    %c0_i32_1 = arith.constant 0 : i32
    return %c0_i32, %c0_i32_0 : i32, i32
  }
  func.func @transform_7(%arg0: i32) -> (i32, i32) {
    %c0_i32 = arith.constant 0 : i32
    %c0_i32_0 = arith.constant 0 : i32
    %c0_i32_1 = arith.constant 0 : i32
    return %c0_i32, %c0_i32_0 : i32, i32
  }
  func.func @transform_8(%arg0: i32) -> (i32, i32) {
    %c0_i32 = arith.constant 0 : i32
    %c0_i32_0 = arith.constant 0 : i32
    %c0_i32_1 = arith.constant 0 : i32
    return %c0_i32, %c0_i32_0 : i32, i32
  }
  func.func @transform_9(%arg0: i32) -> (i32, i32) {
    %c0_i32 = arith.constant 0 : i32
    %c0_i32_0 = arith.constant 0 : i32
    %c0_i32_1 = arith.constant 0 : i32
    return %c0_i32, %c0_i32_0 : i32, i32
  }
  func.func @transform_10(%arg0: i32) -> (i32, i32) {
    %c0_i32 = arith.constant 0 : i32
    %c0_i32_0 = arith.constant 0 : i32
    %c0_i32_1 = arith.constant 0 : i32
    return %c0_i32, %c0_i32_0 : i32, i32
  }
  func.func @transform_11(%arg0: i32) -> (i32, i32) {
    %c0_i32 = arith.constant 0 : i32
    %c0_i32_0 = arith.constant 0 : i32
    %c0_i32_1 = arith.constant 0 : i32
    return %c0_i32, %c0_i32_0 : i32, i32
  }
  func.func @transform_12(%arg0: i32) -> (i32, i32) {
    %c0_i32 = arith.constant 0 : i32
    %c0_i32_0 = arith.constant 0 : i32
    return %arg0, %c0_i32 : i32, i32
  }
  func.func @transform_13(%arg0: i32) -> (i32, i32) {
    %c0_i32 = arith.constant 0 : i32
    %c0_i32_0 = arith.constant 0 : i32
    return %arg0, %c0_i32 : i32, i32
  }
}

</mosaic_0001>

<llo_original>
// kernel: tpu_custom_call.1
$region0: #{tpu_custom_call.1}
  #allocation0 [shape = 'u32[]', space=smem, size = 0x4, offset = 0x4, fixed_abs, tag = 'smem constant byte address 0x4 - core index']
  #allocation1 [shape = 'u32[144,128]{1,0:T(1,128)}', space=vmem, size = 0x12000, scoped, tag = 'internal scratch']
  #allocation2 [shape = 'f32[1,1]{1,0:T(1,128)S(1)}', space=vmem, size = 0x200, scoped, tag = 'scoped memory for tpu_custom_call.1']
  %s0 = inlined_call_operand.hbm [shape: bf16[8,1024], index: 0, kind: input, shape index: {}]
  %s1 = inlined_call_operand.hbm [shape: f32[8,128], index: 1, kind: input, shape index: {}]
  %s2 = inlined_call_operand.hbm [shape: bf16[1024,128], index: 2, kind: input, shape index: {}]
  %s3 = inlined_call_operand.vmem [shape: f32[1,128], index: 3, kind: input, shape index: {}]
  %s4 = inlined_call_operand.hbm [shape: bf16[128,256], index: 4, kind: input, shape index: {}]
  %s5 = inlined_call_operand.vmem [shape: f32[1,256], index: 5, kind: input, shape index: {}]
  %s6 = inlined_call_operand.vmem [shape: f32[1,128], index: 6, kind: input, shape index: {}]
  %s7 = inlined_call_operand.<no memory space> [shape: f32[1,1], index: 7, kind: input, shape index: {}]
  %s8 = inlined_call_operand.hbm [shape: bf16[128,128], index: 8, kind: input, shape index: {}]
  %s9 = inlined_call_operand.vmem [shape: f32[1,128], index: 9, kind: input, shape index: {}]
  %s10 = inlined_call_operand.hbm [shape: bf16[128,1024], index: 10, kind: input, shape index: {}]
  %s11 = inlined_call_operand.vmem [shape: f32[1,1024], index: 11, kind: input, shape index: {}]
  %s12 = inlined_call_operand.hbm [shape: bf16[8,1024], index: 12, kind: output, shape index: {0}]
  %s13 = inlined_call_operand.hbm [shape: f32[8,384], index: 13, kind: output, shape index: {1}]
  %14 = xla_tuple %s12, %s13
  %s15 = sld [smem:[#allocation0]]
  $region90: #{tpu_custom_call.1} parent=0
    _
  %s17 = ssub.s32 1, %s15
  %s18 = scalar_select 0, %s17, %s15
  %v19 = vstv %s7
  %20 = vst [vmem:[#allocation2] sm:$0x1] %v19
  $region1: #{tpu_custom_call.1} parent=0
    #allocation3 [shape = 'u8[16384]{0}', space=vmem, size = 0x4000, scoped, tag = 'input window, operand 0, single buffered']
    #allocation4 [shape = 's32[1]{0}', space=sflag, size = 0x4, scoped, tag = 'scoped memory for tpu_custom_call.1']
    #allocation5 [shape = 's32[1]{0}', space=sflag, size = 0x4, scoped, tag = 'scoped memory for tpu_custom_call.1']
    #allocation6 [shape = 'u8[4096]{0}', space=vmem, size = 0x1000, scoped, tag = 'input window, operand 1, single buffered']
    #allocation7 [shape = 's32[1]{0}', space=sflag, size = 0x4, scoped, tag = 'scoped memory for tpu_custom_call.1']
    #allocation8 [shape = 'u8[262144]{0}', space=vmem, size = 0x40000, scoped, tag = 'input window, operand 2, single buffered']
    #allocation9 [shape = 'u8[65536]{0}', space=vmem, size = 0x10000, scoped, tag = 'input window, operand 4, single buffered']
    #allocation10 [shape = 's32[1]{0}', space=sflag, size = 0x4, scoped, tag = 'scoped memory for tpu_custom_call.1']
    #allocation11 [shape = 'u8[32768]{0}', space=vmem, size = 0x8000, scoped, tag = 'input window, operand 8, single buffered']
    #allocation12 [shape = 'u8[262144]{0}', space=vmem, size = 0x40000, scoped, tag = 'input window, operand 10, single buffered']
    #allocation13 [shape = 's32[1]{0}', space=sflag, size = 0x4, scoped, tag = 'scoped memory for tpu_custom_call.1']
    #allocation14 [shape = 'u8[16384]{0}', space=vmem, size = 0x4000, scoped, tag = 'output window, operand 0, single buffered']
    #allocation15 [shape = 'u8[12288]{0}', space=vmem, size = 0x3000, scoped, tag = 'output window, operand 1, single buffered']
    #allocation16 [shape = 's32[1]{0}', space=sflag, size = 0x4, scoped, tag = 'scoped memory for tpu_custom_call.1']
    %21 = vsyncpa [#allocation4], 0
    %22 = vsyncpa [#allocation7], 0
    %23 = vsyncpa [#allocation10], 0
    %24 = vsyncpa [#allocation13], 0
    %25 = vsyncpa [#allocation5], 0
    %26 = vsyncpa [#allocation16], 0
    // Predicated region
    $region2: #{tpu_custom_call.1} parent=1 // pred_check
      _
    $region3: #{tpu_custom_call.1} parent=1 // pred_check_branch
      %28 = sbr.rel (0) target = $region5
    $region4: #{tpu_custom_call.1} parent=1 // pred_region
      %s30 = ssub.s32 512, 512
      %31 = vsyncadd [#allocation4], %s30
      %s33 = sshll.u32 [#allocation3], 4
      %s34 = int_to_ptr.vmem [resolvable:$true] %s33
      %36 = dma.hbm_to_vmem [thread:$0]  %s0, 512, %s34, [#allocation4]
    $region5: #{tpu_custom_call.1} parent=1 // pred_fallthru
      _
    // Predicated region
    $region6: #{tpu_custom_call.1} parent=1 // pred_check
      _
    $region7: #{tpu_custom_call.1} parent=1 // pred_check_branch
      %38 = sbr.rel (0) target = $region9
    $region8: #{tpu_custom_call.1} parent=1 // pred_region
      %s40 = ssub.s32 128, 128
      %41 = vsyncadd [#allocation7], %s40
      %s43 = sshll.u32 [#allocation6], 4
      %s44 = int_to_ptr.vmem [resolvable:$true] %s43
      %46 = dma.hbm_to_vmem [thread:$0]  %s1, 128, %s44, [#allocation7]
    $region9: #{tpu_custom_call.1} parent=1 // pred_fallthru
      _
    // Predicated region
    $region10: #{tpu_custom_call.1} parent=1 // pred_check
      _
    $region11: #{tpu_custom_call.1} parent=1 // pred_check_branch
      %48 = sbr.rel (0) target = $region13
    $region12: #{tpu_custom_call.1} parent=1 // pred_region
      %s50 = ssub.s32 8192, 8192
      %51 = vsyncadd [#allocation7], %s50
      %s52 = sshll.u32 [#allocation8], 4
      %s53 = int_to_ptr.vmem [resolvable:$true] %s52
      %58 = dma.hbm_to_vmem [thread:$0]  %s2, 8192, %s53, [#allocation7], 64, 64, 4
    $region13: #{tpu_custom_call.1} parent=1 // pred_fallthru
      _
    // Predicated region
    $region14: #{tpu_custom_call.1} parent=1 // pred_check
      _
    $region15: #{tpu_custom_call.1} parent=1 // pred_check_branch
      %60 = sbr.rel (0) target = $region17
    $region16: #{tpu_custom_call.1} parent=1 // pred_region
      _
    $region17: #{tpu_custom_call.1} parent=1 // pred_fallthru
      _
    // Predicated region
    $region18: #{tpu_custom_call.1} parent=1 // pred_check
      _
    $region19: #{tpu_custom_call.1} parent=1 // pred_check_branch
      %62 = sbr.rel (0) target = $region21
    $region20: #{tpu_custom_call.1} parent=1 // pred_region
      %s64 = ssub.s32 2048, 2048
      %65 = vsyncadd [#allocation10], %s64
      %s66 = sshll.u32 [#allocation9], 4
      %s67 = int_to_ptr.vmem [resolvable:$true] %s66
      %72 = dma.hbm_to_vmem [thread:$0]  %s4, 2048, %s67, [#allocation10], 128, 128, 8
    $region21: #{tpu_custom_call.1} parent=1 // pred_fallthru
      _
    // Predicated region
    $region22: #{tpu_custom_call.1} parent=1 // pred_check
      _
    $region23: #{tpu_custom_call.1} parent=1 // pred_check_branch
      %74 = sbr.rel (0) target = $region25
    $region24: #{tpu_custom_call.1} parent=1 // pred_region
      _
    $region25: #{tpu_custom_call.1} parent=1 // pred_fallthru
      _
    // Predicated region
    $region26: #{tpu_custom_call.1} parent=1 // pred_check
      _
    $region27: #{tpu_custom_call.1} parent=1 // pred_check_branch
      %76 = sbr.rel (0) target = $region29
    $region28: #{tpu_custom_call.1} parent=1 // pred_region
      _
    $region29: #{tpu_custom_call.1} parent=1 // pred_fallthru
      _
    // Predicated region
    $region30: #{tpu_custom_call.1} parent=1 // pred_check
      _
    $region31: #{tpu_custom_call.1} parent=1 // pred_check_branch
      %78 = sbr.rel (0) target = $region33
    $region32: #{tpu_custom_call.1} parent=1 // pred_region
      _
    $region33: #{tpu_custom_call.1} parent=1 // pred_fallthru
      _
    // Predicated region
    $region34: #{tpu_custom_call.1} parent=1 // pred_check
      _
    $region35: #{tpu_custom_call.1} parent=1 // pred_check_branch
      %80 = sbr.rel (0) target = $region37
    $region36: #{tpu_custom_call.1} parent=1 // pred_region
      %s82 = ssub.s32 1024, 1024
      %83 = vsyncadd [#allocation10], %s82
      %s84 = sshll.u32 [#allocation11], 4
      %s85 = int_to_ptr.vmem [resolvable:$true] %s84
      %90 = dma.hbm_to_vmem [thread:$0]  %s8, 1024, %s85, [#allocation10], 64, 64, 4
    $region37: #{tpu_custom_call.1} parent=1 // pred_fallthru
      _
    // Predicated region
    $region38: #{tpu_custom_call.1} parent=1 // pred_check
      _
    $region39: #{tpu_custom_call.1} parent=1 // pred_check_branch
      %92 = sbr.rel (0) target = $region41
    $region40: #{tpu_custom_call.1} parent=1 // pred_region
      _
    $region41: #{tpu_custom_call.1} parent=1 // pred_fallthru
      _
    // Predicated region
    $region42: #{tpu_custom_call.1} parent=1 // pred_check
      _
    $region43: #{tpu_custom_call.1} parent=1 // pred_check_branch
      %94 = sbr.rel (0) target = $region45
    $region44: #{tpu_custom_call.1} parent=1 // pred_region
      %s96 = ssub.s32 8192, 8192
      %97 = vsyncadd [#allocation13], %s96
      %s98 = sshll.u32 [#allocation12], 4
      %s99 = int_to_ptr.vmem [resolvable:$true] %s98
      %104 = dma.hbm_to_vmem [thread:$0]  %s10, 8192, %s99, [#allocation13], 512, 512, 32
    $region45: #{tpu_custom_call.1} parent=1 // pred_fallthru
      _
    // Predicated region
    $region46: #{tpu_custom_call.1} parent=1 // pred_check
      _
    $region47: #{tpu_custom_call.1} parent=1 // pred_check_branch
      %106 = sbr.rel (0) target = $region49
    $region48: #{tpu_custom_call.1} parent=1 // pred_region
      _
    $region49: #{tpu_custom_call.1} parent=1 // pred_fallthru
      _
    // Predicated region
    $region50: #{tpu_custom_call.1} parent=1 // pred_check
      _
    $region51: #{tpu_custom_call.1} parent=1 // pred_check_branch
      %108 = sbr.rel (0) target = $region53
    $region52: #{tpu_custom_call.1} parent=1 // pred_region
      %109 = dma.done [#allocation4], 512
    $region53: #{tpu_custom_call.1} parent=1 // pred_fallthru
      _
    // Predicated region
    $region54: #{tpu_custom_call.1} parent=1 // pred_check
      _
    $region55: #{tpu_custom_call.1} parent=1 // pred_check_branch
      %111 = sbr.rel (0) target = $region57
    $region56: #{tpu_custom_call.1} parent=1 // pred_region
      %112 = dma.done [#allocation7], 128
    $region57: #{tpu_custom_call.1} parent=1 // pred_fallthru
      _
    // Predicated region
    $region58: #{tpu_custom_call.1} parent=1 // pred_check
      _
    $region59: #{tpu_custom_call.1} parent=1 // pred_check_branch
      %114 = sbr.rel (0) target = $region61
    $region60: #{tpu_custom_call.1} parent=1 // pred_region
      %115 = dma.done [#allocation7], 8192
    $region61: #{tpu_custom_call.1} parent=1 // pred_fallthru
      _
    // Predicated region
    $region62: #{tpu_custom_call.1} parent=1 // pred_check
      _
    $region63: #{tpu_custom_call.1} parent=1 // pred_check_branch
      %117 = sbr.rel (0) target = $region65
    $region64: #{tpu_custom_call.1} parent=1 // pred_region
      %118 = dma.done [#allocation10], 2048
    $region65: #{tpu_custom_call.1} parent=1 // pred_fallthru
      _
    // Predicated region
    $region66: #{tpu_custom_call.1} parent=1 // pred_check
      _
    $region67: #{tpu_custom_call.1} parent=1 // pred_check_branch
      %120 = sbr.rel (0) target = $region69
    $region68: #{tpu_custom_call.1} parent=1 // pred_region
      %121 = dma.done [#allocation10], 1024
    $region69: #{tpu_custom_call.1} parent=1 // pred_fallthru
      _
    // Predicated region
    $region70: #{tpu_custom_call.1} parent=1 // pred_check
      _
    $region71: #{tpu_custom_call.1} parent=1 // pred_check_branch
      %123 = sbr.rel (0) target = $region73
    $region72: #{tpu_custom_call.1} parent=1 // pred_region
      %124 = dma.done [#allocation13], 8192
    $region73: #{tpu_custom_call.1} parent=1 // pred_fallthru
      _
    %v126 = vld [vmem:[#allocation3] sm:$0xff]
    %v127 = vld [vmem:[#allocation3 + $0x8] sm:$0xff]
    %v128 = vld [vmem:[#allocation3 + $0x10] sm:$0xff]
    %v129 = vld [vmem:[#allocation3 + $0x18] sm:$0xff]
    %v130 = vld [vmem:[#allocation6] sm:$0xff]
    %v131 = vld [vmem:[#allocation8] sm:$0xf]
    %v132 = vld [vmem:[#allocation8 + $0x4] sm:$0xf]
    %v133 = vld [vmem:[#allocation8 + $0x8] sm:$0xf]
    %v134 = vld [vmem:[#allocation8 + $0xc] sm:$0xf]
    %v135 = vld [vmem:[#allocation8 + $0x10] sm:$0xf]
    %v136 = vld [vmem:[#allocation8 + $0x14] sm:$0xf]
    %v137 = vld [vmem:[#allocation8 + $0x18] sm:$0xf]
    %v138 = vld [vmem:[#allocation8 + $0x1c] sm:$0xf]
    %v139 = vld [vmem:[#allocation8 + $0x20] sm:$0xf]
    %v140 = vld [vmem:[#allocation8 + $0x24] sm:$0xf]
    %v141 = vld [vmem:[#allocation8 + $0x28] sm:$0xf]
    %v142 = vld [vmem:[#allocation8 + $0x2c] sm:$0xf]
    %v143 = vld [vmem:[#allocation8 + $0x30] sm:$0xf]
    %v144 = vld [vmem:[#allocation8 + $0x34] sm:$0xf]
    %v145 = vld [vmem:[#allocation8 + $0x38] sm:$0xf]
    %v146 = vld [vmem:[#allocation8 + $0x3c] sm:$0xf]
    %v147 = vld [vmem:[#allocation8 + $0x40] sm:$0xf]
    %v148 = vld [vmem:[#allocation8 + $0x44] sm:$0xf]
    %v149 = vld [vmem:[#allocation8 + $0x48] sm:$0xf]
    %v150 = vld [vmem:[#allocation8 + $0x4c] sm:$0xf]
    %v151 = vld [vmem:[#allocation8 + $0x50] sm:$0xf]
    %v152 = vld [vmem:[#allocation8 + $0x54] sm:$0xf]
    %v153 = vld [vmem:[#allocation8 + $0x58] sm:$0xf]
    %v154 = vld [vmem:[#allocation8 + $0x5c] sm:$0xf]
    %v155 = vld [vmem:[#allocation8 + $0x60] sm:$0xf]
    %v156 = vld [vmem:[#allocation8 + $0x64] sm:$0xf]
    %v157 = vld [vmem:[#allocation8 + $0x68] sm:$0xf]
    %v158 = vld [vmem:[#allocation8 + $0x6c] sm:$0xf]
    %v159 = vld [vmem:[#allocation8 + $0x70] sm:$0xf]
    %v160 = vld [vmem:[#allocation8 + $0x74] sm:$0xf]
    %v161 = vld [vmem:[#allocation8 + $0x78] sm:$0xf]
    %v162 = vld [vmem:[#allocation8 + $0x7c] sm:$0xf]
    %v163 = vld [vmem:[#allocation8 + $0x80] sm:$0xf]
    %v164 = vld [vmem:[#allocation8 + $0x84] sm:$0xf]
    %v165 = vld [vmem:[#allocation8 + $0x88] sm:$0xf]
    %v166 = vld [vmem:[#allocation8 + $0x8c] sm:$0xf]
    %v167 = vld [vmem:[#allocation8 + $0x90] sm:$0xf]
    %v168 = vld [vmem:[#allocation8 + $0x94] sm:$0xf]
    %v169 = vld [vmem:[#allocation8 + $0x98] sm:$0xf]
    %v170 = vld [vmem:[#allocation8 + $0x9c] sm:$0xf]
    %v171 = vld [vmem:[#allocation8 + $0xa0] sm:$0xf]
    %v172 = vld [vmem:[#allocation8 + $0xa4] sm:$0xf]
    %v173 = vld [vmem:[#allocation8 + $0xa8] sm:$0xf]
    %v174 = vld [vmem:[#allocation8 + $0xac] sm:$0xf]
    %v175 = vld [vmem:[#allocation8 + $0xb0] sm:$0xf]
    %v176 = vld [vmem:[#allocation8 + $0xb4] sm:$0xf]
    %v177 = vld [vmem:[#allocation8 + $0xb8] sm:$0xf]
    %v178 = vld [vmem:[#allocation8 + $0xbc] sm:$0xf]
    %v179 = vld [vmem:[#allocation8 + $0xc0] sm:$0xf]
    %v180 = vld [vmem:[#allocation8 + $0xc4] sm:$0xf]
    %v181 = vld [vmem:[#allocation8 + $0xc8] sm:$0xf]
    %v182 = vld [vmem:[#allocation8 + $0xcc] sm:$0xf]
    %v183 = vld [vmem:[#allocation8 + $0xd0] sm:$0xf]
    %v184 = vld [vmem:[#allocation8 + $0xd4] sm:$0xf]
    %v185 = vld [vmem:[#allocation8 + $0xd8] sm:$0xf]
    %v186 = vld [vmem:[#allocation8 + $0xdc] sm:$0xf]
    %v187 = vld [vmem:[#allocation8 + $0xe0] sm:$0xf]
    %v188 = vld [vmem:[#allocation8 + $0xe4] sm:$0xf]
    %v189 = vld [vmem:[#allocation8 + $0xe8] sm:$0xf]
    %v190 = vld [vmem:[#allocation8 + $0xec] sm:$0xf]
    %v191 = vld [vmem:[#allocation8 + $0xf0] sm:$0xf]
    %v192 = vld [vmem:[#allocation8 + $0xf4] sm:$0xf]
    %v193 = vld [vmem:[#allocation8 + $0xf8] sm:$0xf]
    %v194 = vld [vmem:[#allocation8 + $0xfc] sm:$0xf]
    %v195 = vld [vmem:[#allocation8 + $0x100] sm:$0xf]
    %v196 = vld [vmem:[#allocation8 + $0x104] sm:$0xf]
    %v197 = vld [vmem:[#allocation8 + $0x108] sm:$0xf]
    %v198 = vld [vmem:[#allocation8 + $0x10c] sm:$0xf]
    %v199 = vld [vmem:[#allocation8 + $0x110] sm:$0xf]
    %v200 = vld [vmem:[#allocation8 + $0x114] sm:$0xf]
    %v201 = vld [vmem:[#allocation8 + $0x118] sm:$0xf]
    %v202 = vld [vmem:[#allocation8 + $0x11c] sm:$0xf]
    %v203 = vld [vmem:[#allocation8 + $0x120] sm:$0xf]
    %v204 = vld [vmem:[#allocation8 + $0x124] sm:$0xf]
    %v205 = vld [vmem:[#allocation8 + $0x128] sm:$0xf]
    %v206 = vld [vmem:[#allocation8 + $0x12c] sm:$0xf]
    %v207 = vld [vmem:[#allocation8 + $0x130] sm:$0xf]
    %v208 = vld [vmem:[#allocation8 + $0x134] sm:$0xf]
    %v209 = vld [vmem:[#allocation8 + $0x138] sm:$0xf]
    %v210 = vld [vmem:[#allocation8 + $0x13c] sm:$0xf]
    %v211 = vld [vmem:[#allocation8 + $0x140] sm:$0xf]
    %v212 = vld [vmem:[#allocation8 + $0x144] sm:$0xf]
    %v213 = vld [vmem:[#allocation8 + $0x148] sm:$0xf]
    %v214 = vld [vmem:[#allocation8 + $0x14c] sm:$0xf]
    %v215 = vld [vmem:[#allocation8 + $0x150] sm:$0xf]
    %v216 = vld [vmem:[#allocation8 + $0x154] sm:$0xf]
    %v217 = vld [vmem:[#allocation8 + $0x158] sm:$0xf]
    %v218 = vld [vmem:[#allocation8 + $0x15c] sm:$0xf]
    %v219 = vld [vmem:[#allocation8 + $0x160] sm:$0xf]
    %v220 = vld [vmem:[#allocation8 + $0x164] sm:$0xf]
    %v221 = vld [vmem:[#allocation8 + $0x168] sm:$0xf]
    %v222 = vld [vmem:[#allocation8 + $0x16c] sm:$0xf]
    %v223 = vld [vmem:[#allocation8 + $0x170] sm:$0xf]
    %v224 = vld [vmem:[#allocation8 + $0x174] sm:$0xf]
    %v225 = vld [vmem:[#allocation8 + $0x178] sm:$0xf]
    %v226 = vld [vmem:[#allocation8 + $0x17c] sm:$0xf]
    %v227 = vld [vmem:[#allocation8 + $0x180] sm:$0xf]
    %v228 = vld [vmem:[#allocation8 + $0x184] sm:$0xf]
    %v229 = vld [vmem:[#allocation8 + $0x188] sm:$0xf]
    %v230 = vld [vmem:[#allocation8 + $0x18c] sm:$0xf]
    %v231 = vld [vmem:[#allocation8 + $0x190] sm:$0xf]
    %v232 = vld [vmem:[#allocation8 + $0x194] sm:$0xf]
    %v233 = vld [vmem:[#allocation8 + $0x198] sm:$0xf]
    %v234 = vld [vmem:[#allocation8 + $0x19c] sm:$0xf]
    %v235 = vld [vmem:[#allocation8 + $0x1a0] sm:$0xf]
    %v236 = vld [vmem:[#allocation8 + $0x1a4] sm:$0xf]
    %v237 = vld [vmem:[#allocation8 + $0x1a8] sm:$0xf]
    %v238 = vld [vmem:[#allocation8 + $0x1ac] sm:$0xf]
    %v239 = vld [vmem:[#allocation8 + $0x1b0] sm:$0xf]
    %v240 = vld [vmem:[#allocation8 + $0x1b4] sm:$0xf]
    %v241 = vld [vmem:[#allocation8 + $0x1b8] sm:$0xf]
    %v242 = vld [vmem:[#allocation8 + $0x1bc] sm:$0xf]
    %v243 = vld [vmem:[#allocation8 + $0x1c0] sm:$0xf]
    %v244 = vld [vmem:[#allocation8 + $0x1c4] sm:$0xf]
    %v245 = vld [vmem:[#allocation8 + $0x1c8] sm:$0xf]
    %v246 = vld [vmem:[#allocation8 + $0x1cc] sm:$0xf]
    %v247 = vld [vmem:[#allocation8 + $0x1d0] sm:$0xf]
    %v248 = vld [vmem:[#allocation8 + $0x1d4] sm:$0xf]
    %v249 = vld [vmem:[#allocation8 + $0x1d8] sm:$0xf]
    %v250 = vld [vmem:[#allocation8 + $0x1dc] sm:$0xf]
    %v251 = vld [vmem:[#allocation8 + $0x1e0] sm:$0xf]
    %v252 = vld [vmem:[#allocation8 + $0x1e4] sm:$0xf]
    %v253 = vld [vmem:[#allocation8 + $0x1e8] sm:$0xf]
    %v254 = vld [vmem:[#allocation8 + $0x1ec] sm:$0xf]
    %v255 = vld [vmem:[#allocation8 + $0x1f0] sm:$0xf]
    %v256 = vld [vmem:[#allocation8 + $0x1f4] sm:$0xf]
    %v257 = vld [vmem:[#allocation8 + $0x1f8] sm:$0xf]
    %v258 = vld [vmem:[#allocation8 + $0x1fc] sm:$0xf]
    %v259 = vld [vmem:[%s3] sm:$0x1]
    %v261 = vlaneseq
    %v262 = vshrl.u32 %v261, 7
    %v263 = vsub.s32 0, %v262
    %v264 = vrot.slane %v259, %v263
    %v270 = vunpack.c.l.b16 %v126
    %v271 = vunpack.c.h.b16 %v126
    %v272 = vunpack.c.l.b16 %v127
    %v273 = vunpack.c.h.b16 %v127
    %v274 = vunpack.c.l.b16 %v128
    %v275 = vunpack.c.h.b16 %v128
    %v276 = vunpack.c.l.b16 %v129
    %v277 = vunpack.c.h.b16 %v129
    %v278 = vpack.c.b16 %v270, %v270
    %v279 = vpack.c.b16 %v271, %v271
    %v280 = vpack.c.b16 %v272, %v272
    %v281 = vpack.c.b16 %v273, %v273
    %v282 = vpack.c.b16 %v274, %v274
    %v283 = vpack.c.b16 %v275, %v275
    %v284 = vpack.c.b16 %v276, %v276
    %v285 = vpack.c.b16 %v277, %v277
    %v422 = vunpack.c.l.b16 %v131
    %v423 = vunpack.c.l.b16 %v132
    %v424 = vunpack.c.l.b16 %v133
    %v425 = vunpack.c.l.b16 %v134
    %v426 = vunpack.c.l.b16 %v135
    %v427 = vunpack.c.l.b16 %v136
    %v428 = vunpack.c.l.b16 %v137
    %v429 = vunpack.c.l.b16 %v138
    %v430 = vunpack.c.l.b16 %v139
    %v431 = vunpack.c.l.b16 %v140
    %v432 = vunpack.c.l.b16 %v141
    %v433 = vunpack.c.l.b16 %v142
    %v434 = vunpack.c.l.b16 %v143
    %v435 = vunpack.c.l.b16 %v144
    %v436 = vunpack.c.l.b16 %v145
    %v437 = vunpack.c.l.b16 %v146
    %v438 = vunpack.c.l.b16 %v147
    %v439 = vunpack.c.l.b16 %v148
    %v440 = vunpack.c.l.b16 %v149
    %v441 = vunpack.c.l.b16 %v150
    %v442 = vunpack.c.l.b16 %v151
    %v443 = vunpack.c.l.b16 %v152
    %v444 = vunpack.c.l.b16 %v153
    %v445 = vunpack.c.l.b16 %v154
    %v446 = vunpack.c.l.b16 %v155
    %v447 = vunpack.c.l.b16 %v156
    %v448 = vunpack.c.l.b16 %v157
    %v449 = vunpack.c.l.b16 %v158
    %v450 = vunpack.c.l.b16 %v159
    %v451 = vunpack.c.l.b16 %v160
    %v452 = vunpack.c.l.b16 %v161
    %v453 = vunpack.c.l.b16 %v162
    %v454 = vunpack.c.l.b16 %v163
    %v455 = vunpack.c.l.b16 %v164
    %v456 = vunpack.c.l.b16 %v165
    %v457 = vunpack.c.l.b16 %v166
    %v458 = vunpack.c.l.b16 %v167
    %v459 = vunpack.c.l.b16 %v168
    %v460 = vunpack.c.l.b16 %v169
    %v461 = vunpack.c.l.b16 %v170
    %v462 = vunpack.c.l.b16 %v171
    %v463 = vunpack.c.l.b16 %v172
    %v464 = vunpack.c.l.b16 %v173
    %v465 = vunpack.c.l.b16 %v174
    %v466 = vunpack.c.l.b16 %v175
    %v467 = vunpack.c.l.b16 %v176
    %v468 = vunpack.c.l.b16 %v177
    %v469 = vunpack.c.l.b16 %v178
    %v470 = vunpack.c.l.b16 %v179
    %v471 = vunpack.c.l.b16 %v180
    %v472 = vunpack.c.l.b16 %v181
    %v473 = vunpack.c.l.b16 %v182
    %v474 = vunpack.c.l.b16 %v183
    %v475 = vunpack.c.l.b16 %v184
    %v476 = vunpack.c.l.b16 %v185
    %v477 = vunpack.c.l.b16 %v186
    %v478 = vunpack.c.l.b16 %v187
    %v479 = vunpack.c.l.b16 %v188
    %v480 = vunpack.c.l.b16 %v189
    %v481 = vunpack.c.l.b16 %v190
    %v482 = vunpack.c.l.b16 %v191
    %v483 = vunpack.c.l.b16 %v192
    %v484 = vunpack.c.l.b16 %v193
    %v485 = vunpack.c.l.b16 %v194
    %v486 = vunpack.c.l.b16 %v195
    %v487 = vunpack.c.l.b16 %v196
    %v488 = vunpack.c.l.b16 %v197
    %v489 = vunpack.c.l.b16 %v198
    %v490 = vunpack.c.l.b16 %v199
    %v491 = vunpack.c.l.b16 %v200
    %v492 = vunpack.c.l.b16 %v201
    %v493 = vunpack.c.l.b16 %v202
    %v494 = vunpack.c.l.b16 %v203
    %v495 = vunpack.c.l.b16 %v204
    %v496 = vunpack.c.l.b16 %v205
    %v497 = vunpack.c.l.b16 %v206
    %v498 = vunpack.c.l.b16 %v207
    %v499 = vunpack.c.l.b16 %v208
    %v500 = vunpack.c.l.b16 %v209
    %v501 = vunpack.c.l.b16 %v210
    %v502 = vunpack.c.l.b16 %v211
    %v503 = vunpack.c.l.b16 %v212
    %v504 = vunpack.c.l.b16 %v213
    %v505 = vunpack.c.l.b16 %v214
    %v506 = vunpack.c.l.b16 %v215
    %v507 = vunpack.c.l.b16 %v216
    %v508 = vunpack.c.l.b16 %v217
    %v509 = vunpack.c.l.b16 %v218
    %v510 = vunpack.c.l.b16 %v219
    %v511 = vunpack.c.l.b16 %v220
    %v512 = vunpack.c.l.b16 %v221
    %v513 = vunpack.c.l.b16 %v222
    %v514 = vunpack.c.l.b16 %v223
    %v515 = vunpack.c.l.b16 %v224
    %v516 = vunpack.c.l.b16 %v225
    %v517 = vunpack.c.l.b16 %v226
    %v518 = vunpack.c.l.b16 %v227
    %v519 = vunpack.c.l.b16 %v228
    %v520 = vunpack.c.l.b16 %v229
    %v521 = vunpack.c.l.b16 %v230
    %v522 = vunpack.c.l.b16 %v231
    %v523 = vunpack.c.l.b16 %v232
    %v524 = vunpack.c.l.b16 %v233
    %v525 = vunpack.c.l.b16 %v234
    %v526 = vunpack.c.l.b16 %v235
    %v527 = vunpack.c.l.b16 %v236
    %v528 = vunpack.c.l.b16 %v237
    %v529 = vunpack.c.l.b16 %v238
    %v530 = vunpack.c.l.b16 %v239
    %v531 = vunpack.c.l.b16 %v240
    %v532 = vunpack.c.l.b16 %v241
    %v533 = vunpack.c.l.b16 %v242
    %v534 = vunpack.c.l.b16 %v243
    %v535 = vunpack.c.l.b16 %v244
    %v536 = vunpack.c.l.b16 %v245
    %v537 = vunpack.c.l.b16 %v246
    %v538 = vunpack.c.l.b16 %v247
    %v539 = vunpack.c.l.b16 %v248
    %v540 = vunpack.c.l.b16 %v249
    %v541 = vunpack.c.l.b16 %v250
    %v542 = vunpack.c.l.b16 %v251
    %v543 = vunpack.c.l.b16 %v252
    %v544 = vunpack.c.l.b16 %v253
    %v545 = vunpack.c.l.b16 %v254
    %v546 = vunpack.c.l.b16 %v255
    %v547 = vunpack.c.l.b16 %v256
    %v548 = vunpack.c.l.b16 %v257
    %v549 = vunpack.c.l.b16 %v258
    %v550 = vpack.c.b16 %v423, %v422
    %v551 = vpack.c.b16 %v425, %v424
    %v552 = vpack.c.b16 %v427, %v426
    %v553 = vpack.c.b16 %v429, %v428
    %v554 = vpack.c.b16 %v431, %v430
    %v555 = vpack.c.b16 %v433, %v432
    %v556 = vpack.c.b16 %v435, %v434
    %v557 = vpack.c.b16 %v437, %v436
    %v558 = vpack.c.b16 %v439, %v438
    %v559 = vpack.c.b16 %v441, %v440
    %v560 = vpack.c.b16 %v443, %v442
    %v561 = vpack.c.b16 %v445, %v444
    %v562 = vpack.c.b16 %v447, %v446
    %v563 = vpack.c.b16 %v449, %v448
    %v564 = vpack.c.b16 %v451, %v450
    %v565 = vpack.c.b16 %v453, %v452
    %v566 = vpack.c.b16 %v455, %v454
    %v567 = vpack.c.b16 %v457, %v456
    %v568 = vpack.c.b16 %v459, %v458
    %v569 = vpack.c.b16 %v461, %v460
    %v570 = vpack.c.b16 %v463, %v462
    %v571 = vpack.c.b16 %v465, %v464
    %v572 = vpack.c.b16 %v467, %v466
    %v573 = vpack.c.b16 %v469, %v468
    %v574 = vpack.c.b16 %v471, %v470
    %v575 = vpack.c.b16 %v473, %v472
    %v576 = vpack.c.b16 %v475, %v474
    %v577 = vpack.c.b16 %v477, %v476
    %v578 = vpack.c.b16 %v479, %v478
    %v579 = vpack.c.b16 %v481, %v480
    %v580 = vpack.c.b16 %v483, %v482
    %v581 = vpack.c.b16 %v485, %v484
    %v582 = vpack.c.b16 %v487, %v486
    %v583 = vpack.c.b16 %v489, %v488
    %v584 = vpack.c.b16 %v491, %v490
    %v585 = vpack.c.b16 %v493, %v492
    %v586 = vpack.c.b16 %v495, %v494
    %v587 = vpack.c.b16 %v497, %v496
    %v588 = vpack.c.b16 %v499, %v498
    %v589 = vpack.c.b16 %v501, %v500
    %v590 = vpack.c.b16 %v503, %v502
    %v591 = vpack.c.b16 %v505, %v504
    %v592 = vpack.c.b16 %v507, %v506
    %v593 = vpack.c.b16 %v509, %v508
    %v594 = vpack.c.b16 %v511, %v510
    %v595 = vpack.c.b16 %v513, %v512
    %v596 = vpack.c.b16 %v515, %v514
    %v597 = vpack.c.b16 %v517, %v516
    %v598 = vpack.c.b16 %v519, %v518
    %v599 = vpack.c.b16 %v521, %v520
    %v600 = vpack.c.b16 %v523, %v522
    %v601 = vpack.c.b16 %v525, %v524
    %v602 = vpack.c.b16 %v527, %v526
    %v603 = vpack.c.b16 %v529, %v528
    %v604 = vpack.c.b16 %v531, %v530
    %v605 = vpack.c.b16 %v533, %v532
    %v606 = vpack.c.b16 %v535, %v534
    %v607 = vpack.c.b16 %v537, %v536
    %v608 = vpack.c.b16 %v539, %v538
    %v609 = vpack.c.b16 %v541, %v540
    %v610 = vpack.c.b16 %v543, %v542
    %v611 = vpack.c.b16 %v545, %v544
    %v612 = vpack.c.b16 %v547, %v546
    %v613 = vpack.c.b16 %v549, %v548
    %678 = vmatprep.subr.bf16.mxu0 0
    %679 = vmatpush1.bf16.msra.mxu0 %v550
    %680 = vmatprep.subr.bf16.mxu0 0
    %681 = vmatpush1.bf16.msra.mxu0 %v551
    %682 = vmatprep.subr.bf16.mxu0 0
    %683 = vmatpush1.bf16.msra.mxu0 %v552
    %684 = vmatprep.subr.bf16.mxu0 0
    %685 = vmatpush1.bf16.msra.mxu0 %v553
    %686 = vmatprep.subr.bf16.mxu0 0
    %687 = vmatpush1.bf16.msra.mxu0 %v554
    %688 = vmatprep.subr.bf16.mxu0 0
    %689 = vmatpush1.bf16.msra.mxu0 %v555
    %690 = vmatprep.subr.bf16.mxu0 0
    %691 = vmatpush1.bf16.msra.mxu0 %v556
    %692 = vmatprep.subr.bf16.mxu0 0
    %693 = vmatpush1.bf16.msra.mxu0 %v557
    %694 = vmatprep.subr.bf16.mxu0 0
    %695 = vmatpush1.bf16.msra.mxu0 %v558
    %696 = vmatprep.subr.bf16.mxu0 0
    %697 = vmatpush1.bf16.msra.mxu0 %v559
    %698 = vmatprep.subr.bf16.mxu0 0
    %699 = vmatpush1.bf16.msra.mxu0 %v560
    %700 = vmatprep.subr.bf16.mxu0 0
    %701 = vmatpush1.bf16.msra.mxu0 %v561
    %702 = vmatprep.subr.bf16.mxu0 0
    %703 = vmatpush1.bf16.msra.mxu0 %v562
    %704 = vmatprep.subr.bf16.mxu0 0
    %705 = vmatpush1.bf16.msra.mxu0 %v563
    %706 = vmatprep.subr.bf16.mxu0 0
    %707 = vmatpush1.bf16.msra.mxu0 %v564
    %708 = vmatprep.subr.bf16.mxu0 0
    %709 = vmatpush1.bf16.msra.mxu0 %v565
    %710 = vmatprep.mubr.bf16.mxu0 %v279
    %711 = vmatmul.mubr.bf16.gmra.mrb[0].mxu0 %v278
    %v712 = vpop.f32.mrb[0].mxu0
    %v713 = vadd.f32 %v264, %v712
    %v714 = vpop.f32.mrb[0].mxu0
    %v715 = vpop.f32.mrb[0].mxu0
    %v716 = vpop.f32.mrb[0].mxu0
    %717 = vdwg.mxu0
    %718 = vmatprep.subr.bf16.mxu0 0
    %719 = vmatpush1.bf16.msra.mxu0 %v566
    %720 = vmatprep.subr.bf16.mxu0 0
    %721 = vmatpush1.bf16.msra.mxu0 %v567
    %722 = vmatprep.subr.bf16.mxu0 0
    %723 = vmatpush1.bf16.msra.mxu0 %v568
    %724 = vmatprep.subr.bf16.mxu0 0
    %725 = vmatpush1.bf16.msra.mxu0 %v569
    %726 = vmatprep.subr.bf16.mxu0 0
    %727 = vmatpush1.bf16.msra.mxu0 %v570
    %728 = vmatprep.subr.bf16.mxu0 0
    %729 = vmatpush1.bf16.msra.mxu0 %v571
    %730 = vmatprep.subr.bf16.mxu0 0
    %731 = vmatpush1.bf16.msra.mxu0 %v572
    %732 = vmatprep.subr.bf16.mxu0 0
    %733 = vmatpush1.bf16.msra.mxu0 %v573
    %734 = vmatprep.subr.bf16.mxu0 0
    %735 = vmatpush1.bf16.msra.mxu0 %v574
    %736 = vmatprep.subr.bf16.mxu0 0
    %737 = vmatpush1.bf16.msra.mxu0 %v575
    %738 = vmatprep.subr.bf16.mxu0 0
    %739 = vmatpush1.bf16.msra.mxu0 %v576
    %740 = vmatprep.subr.bf16.mxu0 0
    %741 = vmatpush1.bf16.msra.mxu0 %v577
    %742 = vmatprep.subr.bf16.mxu0 0
    %743 = vmatpush1.bf16.msra.mxu0 %v578
    %744 = vmatprep.subr.bf16.mxu0 0
    %745 = vmatpush1.bf16.msra.mxu0 %v579
    %746 = vmatprep.subr.bf16.mxu0 0
    %747 = vmatpush1.bf16.msra.mxu0 %v580
    %748 = vmatprep.subr.bf16.mxu0 0
    %749 = vmatpush1.bf16.msra.mxu0 %v581
    %750 = vmatprep.mubr.bf16.mxu0 %v281
    %751 = vmatmul.mubr.bf16.gmra.mrb[0].mxu0 %v280
    %v752 = vpop.f32.mrb[0].mxu0
    %v753 = vadd.f32 %v713, %v752
    %v754 = vpop.f32.mrb[0].mxu0
    %v755 = vpop.f32.mrb[0].mxu0
    %v756 = vpop.f32.mrb[0].mxu0
    %757 = vdwg.mxu0
    %758 = vmatprep.subr.bf16.mxu0 0
    %759 = vmatpush1.bf16.msra.mxu0 %v582
    %760 = vmatprep.subr.bf16.mxu0 0
    %761 = vmatpush1.bf16.msra.mxu0 %v583
    %762 = vmatprep.subr.bf16.mxu0 0
    %763 = vmatpush1.bf16.msra.mxu0 %v584
    %764 = vmatprep.subr.bf16.mxu0 0
    %765 = vmatpush1.bf16.msra.mxu0 %v585
    %766 = vmatprep.subr.bf16.mxu0 0
    %767 = vmatpush1.bf16.msra.mxu0 %v586
    %768 = vmatprep.subr.bf16.mxu0 0
    %769 = vmatpush1.bf16.msra.mxu0 %v587
    %770 = vmatprep.subr.bf16.mxu0 0
    %771 = vmatpush1.bf16.msra.mxu0 %v588
    %772 = vmatprep.subr.bf16.mxu0 0
    %773 = vmatpush1.bf16.msra.mxu0 %v589
    %774 = vmatprep.subr.bf16.mxu0 0
    %775 = vmatpush1.bf16.msra.mxu0 %v590
    %776 = vmatprep.subr.bf16.mxu0 0
    %777 = vmatpush1.bf16.msra.mxu0 %v591
    %778 = vmatprep.subr.bf16.mxu0 0
    %779 = vmatpush1.bf16.msra.mxu0 %v592
    %780 = vmatprep.subr.bf16.mxu0 0
    %781 = vmatpush1.bf16.msra.mxu0 %v593
    %782 = vmatprep.subr.bf16.mxu0 0
    %783 = vmatpush1.bf16.msra.mxu0 %v594
    %784 = vmatprep.subr.bf16.mxu0 0
    %785 = vmatpush1.bf16.msra.mxu0 %v595
    %786 = vmatprep.subr.bf16.mxu0 0
    %787 = vmatpush1.bf16.msra.mxu0 %v596
    %788 = vmatprep.subr.bf16.mxu0 0
    %789 = vmatpush1.bf16.msra.mxu0 %v597
    %790 = vmatprep.mubr.bf16.mxu0 %v283
    %791 = vmatmul.mubr.bf16.gmra.mrb[0].mxu0 %v282
    %v792 = vpop.f32.mrb[0].mxu0
    %v793 = vadd.f32 %v753, %v792
    %v794 = vpop.f32.mrb[0].mxu0
    %v795 = vpop.f32.mrb[0].mxu0
    %v796 = vpop.f32.mrb[0].mxu0
    %797 = vdwg.mxu0
    %798 = vmatprep.subr.bf16.mxu0 0
    %799 = vmatpush1.bf16.msra.mxu0 %v598
    %800 = vmatprep.subr.bf16.mxu0 0
    %801 = vmatpush1.bf16.msra.mxu0 %v599
    %802 = vmatprep.subr.bf16.mxu0 0
    %803 = vmatpush1.bf16.msra.mxu0 %v600
    %804 = vmatprep.subr.bf16.mxu0 0
    %805 = vmatpush1.bf16.msra.mxu0 %v601
    %806 = vmatprep.subr.bf16.mxu0 0
    %807 = vmatpush1.bf16.msra.mxu0 %v602
    %808 = vmatprep.subr.bf16.mxu0 0
    %809 = vmatpush1.bf16.msra.mxu0 %v603
    %810 = vmatprep.subr.bf16.mxu0 0
    %811 = vmatpush1.bf16.msra.mxu0 %v604
    %812 = vmatprep.subr.bf16.mxu0 0
    %813 = vmatpush1.bf16.msra.mxu0 %v605
    %814 = vmatprep.subr.bf16.mxu0 0
    %815 = vmatpush1.bf16.msra.mxu0 %v606
    %816 = vmatprep.subr.bf16.mxu0 0
    %817 = vmatpush1.bf16.msra.mxu0 %v607
    %818 = vmatprep.subr.bf16.mxu0 0
    %819 = vmatpush1.bf16.msra.mxu0 %v608
    %820 = vmatprep.subr.bf16.mxu0 0
    %821 = vmatpush1.bf16.msra.mxu0 %v609
    %822 = vmatprep.subr.bf16.mxu0 0
    %823 = vmatpush1.bf16.msra.mxu0 %v610
    %824 = vmatprep.subr.bf16.mxu0 0
    %825 = vmatpush1.bf16.msra.mxu0 %v611
    %826 = vmatprep.subr.bf16.mxu0 0
    %827 = vmatpush1.bf16.msra.mxu0 %v612
    %828 = vmatprep.subr.bf16.mxu0 0
    %829 = vmatpush1.bf16.msra.mxu0 %v613
    %830 = vmatprep.mubr.bf16.mxu0 %v285
    %831 = vmatmul.mubr.bf16.gmra.mrb[0].mxu0 %v284
    %v832 = vpop.f32.mrb[0].mxu0
    %v833 = vadd.f32 %v793, %v832
    %v834 = vpop.f32.mrb[0].mxu0
    %v835 = vpop.f32.mrb[0].mxu0
    %v836 = vpop.f32.mrb[0].mxu0
    %837 = vdwg.mxu0
    %v838 = vmax.f32 %v833, 0.0
    %v839 = vpack.c.bf16 %v838, %v838
    %v840 = vld [vmem:[#allocation9] sm:$0xff]
    %v841 = vld [vmem:[#allocation9 + $0x8] sm:$0xff]
    %v842 = vld [vmem:[#allocation9 + $0x10] sm:$0xff]
    %v843 = vld [vmem:[#allocation9 + $0x18] sm:$0xff]
    %v844 = vld [vmem:[#allocation9 + $0x20] sm:$0xff]
    %v845 = vld [vmem:[#allocation9 + $0x28] sm:$0xff]
    %v846 = vld [vmem:[#allocation9 + $0x30] sm:$0xff]
    %v847 = vld [vmem:[#allocation9 + $0x38] sm:$0xff]
    %v848 = vld [vmem:[#allocation9 + $0x40] sm:$0xff]
    %v849 = vld [vmem:[#allocation9 + $0x48] sm:$0xff]
    %v850 = vld [vmem:[#allocation9 + $0x50] sm:$0xff]
    %v851 = vld [vmem:[#allocation9 + $0x58] sm:$0xff]
    %v852 = vld [vmem:[#allocation9 + $0x60] sm:$0xff]
    %v853 = vld [vmem:[#allocation9 + $0x68] sm:$0xff]
    %v854 = vld [vmem:[#allocation9 + $0x70] sm:$0xff]
    %v855 = vld [vmem:[#allocation9 + $0x78] sm:$0xff]
    %v856 = vld [vmem:[%s5] sm:$0x3]
    %v858 = vlaneseq
    %v859 = vshrl.u32 %v858, 7
    %v860 = vsub.s32 0, %v859
    %v861 = vrot.slane %v856, %v860
    %v862 = vlaneseq
    %v863 = vshrl.u32 %v862, 7
    %v864 = vsub.s32 1, %v863
    %v865 = vrot.slane %v856, %v864
    %v884 = vunpack.c.l.b16 %v840
    %v885 = vunpack.c.h.b16 %v840
    %v886 = vunpack.c.l.b16 %v841
    %v887 = vunpack.c.h.b16 %v841
    %v888 = vunpack.c.l.b16 %v842
    %v889 = vunpack.c.h.b16 %v842
    %v890 = vunpack.c.l.b16 %v843
    %v891 = vunpack.c.h.b16 %v843
    %v892 = vunpack.c.l.b16 %v844
    %v893 = vunpack.c.h.b16 %v844
    %v894 = vunpack.c.l.b16 %v845
    %v895 = vunpack.c.h.b16 %v845
    %v896 = vunpack.c.l.b16 %v846
    %v897 = vunpack.c.h.b16 %v846
    %v898 = vunpack.c.l.b16 %v847
    %v899 = vunpack.c.h.b16 %v847
    %v900 = vunpack.c.l.b16 %v848
    %v901 = vunpack.c.h.b16 %v848
    %v902 = vunpack.c.l.b16 %v849
    %v903 = vunpack.c.h.b16 %v849
    %v904 = vunpack.c.l.b16 %v850
    %v905 = vunpack.c.h.b16 %v850
    %v906 = vunpack.c.l.b16 %v851
    %v907 = vunpack.c.h.b16 %v851
    %v908 = vunpack.c.l.b16 %v852
    %v909 = vunpack.c.h.b16 %v852
    %v910 = vunpack.c.l.b16 %v853
    %v911 = vunpack.c.h.b16 %v853
    %v912 = vunpack.c.l.b16 %v854
    %v913 = vunpack.c.h.b16 %v854
    %v914 = vunpack.c.l.b16 %v855
    %v915 = vunpack.c.h.b16 %v855
    %v916 = vpack.c.b16 %v886, %v884
    %v917 = vpack.c.b16 %v887, %v885
    %v918 = vpack.c.b16 %v890, %v888
    %v919 = vpack.c.b16 %v891, %v889
    %v920 = vpack.c.b16 %v894, %v892
    %v921 = vpack.c.b16 %v895, %v893
    %v922 = vpack.c.b16 %v898, %v896
    %v923 = vpack.c.b16 %v899, %v897
    %v924 = vpack.c.b16 %v902, %v900
    %v925 = vpack.c.b16 %v903, %v901
    %v926 = vpack.c.b16 %v906, %v904
    %v927 = vpack.c.b16 %v907, %v905
    %v928 = vpack.c.b16 %v910, %v908
    %v929 = vpack.c.b16 %v911, %v909
    %v930 = vpack.c.b16 %v914, %v912
    %v931 = vpack.c.b16 %v915, %v913
    %948 = vmatprep.subr.bf16.mxu0 %v917
    %949 = vmatpush1.bf16.msra.mxu0 %v916
    %950 = vmatprep.subr.bf16.mxu0 %v919
    %951 = vmatpush1.bf16.msra.mxu0 %v918
    %952 = vmatprep.subr.bf16.mxu0 %v921
    %953 = vmatpush1.bf16.msra.mxu0 %v920
    %954 = vmatprep.subr.bf16.mxu0 %v923
    %955 = vmatpush1.bf16.msra.mxu0 %v922
    %956 = vmatprep.subr.bf16.mxu0 %v925
    %957 = vmatpush1.bf16.msra.mxu0 %v924
    %958 = vmatprep.subr.bf16.mxu0 %v927
    %959 = vmatpush1.bf16.msra.mxu0 %v926
    %960 = vmatprep.subr.bf16.mxu0 %v929
    %961 = vmatpush1.bf16.msra.mxu0 %v928
    %962 = vmatprep.subr.bf16.mxu0 %v931
    %963 = vmatpush1.bf16.msra.mxu0 %v930
    %964 = vmatprep.subr.bf16.mxu0 0
    %965 = vmatpush1.bf16.msra.mxu0 0
    %966 = vmatprep.subr.bf16.mxu0 0
    %967 = vmatpush1.bf16.msra.mxu0 0
    %968 = vmatprep.subr.bf16.mxu0 0
    %969 = vmatpush1.bf16.msra.mxu0 0
    %970 = vmatprep.subr.bf16.mxu0 0
    %971 = vmatpush1.bf16.msra.mxu0 0
    %972 = vmatprep.subr.bf16.mxu0 0
    %973 = vmatpush1.bf16.msra.mxu0 0
    %974 = vmatprep.subr.bf16.mxu0 0
    %975 = vmatpush1.bf16.msra.mxu0 0
    %976 = vmatprep.subr.bf16.mxu0 0
    %977 = vmatpush1.bf16.msra.mxu0 0
    %978 = vmatprep.subr.bf16.mxu0 0
    %979 = vmatpush1.bf16.msra.mxu0 0
    %980 = vmatprep.mubr.bf16.mxu0 0
    %981 = vmatmul.mubr.bf16.gmra.mrb[0].mxu0 %v839
    %v982 = vpop.f32.mrb[0].mxu0
    %v983 = vadd.f32 %v861, %v982
    %v984 = vpop.f32.mrb[0].mxu0
    %v985 = vadd.f32 %v865, %v984
    %v986 = vpop.f32.mrb[0].mxu0
    %v987 = vpop.f32.mrb[0].mxu0
    %988 = vdwg.mxu0
    %v989 = vlaneseq
    %v990 = vand.u32 %v989, 127
    %vm991 = vcmp.ge.s32.totalorder %v990, 8
    %vm992 = vcmp.lt.s32.totalorder %v990, 12
    %vm993 = vmand %vm991, %vm992
    %vm994 = vcmp.eq.f32.partialorder %v130, 0.0
    %v995 = vsel %vm994, 1, 0
    %996 = vset.pattern.permute.xlu0 127
    %997 = vperm.xlu0 %996, %v995
    %v998 = vpop.permute.xlu0 %997
    %vm999 = vcmp.eq.s32.totalorder %v998, 1
    %vm1000 = vmand %vm993, %vm999
    %v1001 = vsel %vm1000, -2.3025851, %v985
    %1002 = vst [vmem:[#allocation15] sm:$0xff] %v983
    %v1003 = vmul.f32 %v1001, 0.5
    %v1004 = vmul.f32 %v1003, 1.442695
    %v1005 = vpow.pop %v1004
    %v1006 = vmul.f32 %v1005, %v130
    %v1007 = vadd.f32 %v983, %v1006
    %1008 = vst [vmem:[#allocation15 + $0x10] sm:$0xff] %v1007
    %v1009 = vld [vmem:[%s6] sm:$0x1]
    %v1011 = vlaneseq
    %v1012 = vshrl.u32 %v1011, 7
    %v1013 = vsub.s32 0, %v1012
    %v1014 = vrot.slane %v1009, %v1013
    %v1016 = vmul.f32 %v1007, %v1014
    %1017 = vadd.xlane.f32.xlu0 %v1016
    %v1018 = vpop.xlane.xlu0 %1017
    %v1019 = vld [vmem:[#allocation2] sm:$0x1]
    %v1021 = vlaneseq
    %v1022 = vshrl.u32 %v1021, 7
    %v1023 = vsub.s32 0, %v1022
    %v1024 = vrot.slane %v1019, %v1023
    %v1026 = vadd.f32 %v1018, %v1024
    %v1027 = vxor.u32 %v1026, 2147483648
    %v1028 = vmul.f32 %v1027, 1.442695
    %v1029 = vpow.pop %v1028
    %v1030 = vadd.f32 %v1029, 1.0
    %v1031 = vrcp.pop %v1030
    %v1032 = vmul.f32 1.0, %v1031
    %vm1033 = vcmp.eq.s32.totalorder %v990, 127
    %1035 = vset.pattern.permute.xlu0 0
    %1036 = vperm.xlu0 %1035, %v1032
    %v1037 = vpop.permute.xlu0 %1036
    %v1039 = vsel %vm1033, %v1037, %v1001
    %1040 = vst [vmem:[#allocation15 + $0x8] sm:$0xff] %v1039
    %v1041 = vsel %vm1000, 0.0, %v1007
    %v1042 = vpack.c.bf16 %v1041, %v1041
    %v1043 = vld [vmem:[#allocation11] sm:$0xf]
    %v1044 = vld [vmem:[#allocation11 + $0x4] sm:$0xf]
    %v1045 = vld [vmem:[#allocation11 + $0x8] sm:$0xf]
    %v1046 = vld [vmem:[#allocation11 + $0xc] sm:$0xf]
    %v1047 = vld [vmem:[#allocation11 + $0x10] sm:$0xf]
    %v1048 = vld [vmem:[#allocation11 + $0x14] sm:$0xf]
    %v1049 = vld [vmem:[#allocation11 + $0x18] sm:$0xf]
    %v1050 = vld [vmem:[#allocation11 + $0x1c] sm:$0xf]
    %v1051 = vld [vmem:[#allocation11 + $0x20] sm:$0xf]
    %v1052 = vld [vmem:[#allocation11 + $0x24] sm:$0xf]
    %v1053 = vld [vmem:[#allocation11 + $0x28] sm:$0xf]
    %v1054 = vld [vmem:[#allocation11 + $0x2c] sm:$0xf]
    %v1055 = vld [vmem:[#allocation11 + $0x30] sm:$0xf]
    %v1056 = vld [vmem:[#allocation11 + $0x34] sm:$0xf]
    %v1057 = vld [vmem:[#allocation11 + $0x38] sm:$0xf]
    %v1058 = vld [vmem:[#allocation11 + $0x3c] sm:$0xf]
    %v1059 = vld [vmem:[%s9] sm:$0x1]
    %v1061 = vlaneseq
    %v1062 = vshrl.u32 %v1061, 7
    %v1063 = vsub.s32 0, %v1062
    %v1064 = vrot.slane %v1059, %v1063
    %v1082 = vunpack.c.l.b16 %v1043
    %v1083 = vunpack.c.l.b16 %v1044
    %v1084 = vunpack.c.l.b16 %v1045
    %v1085 = vunpack.c.l.b16 %v1046
    %v1086 = vunpack.c.l.b16 %v1047
    %v1087 = vunpack.c.l.b16 %v1048
    %v1088 = vunpack.c.l.b16 %v1049
    %v1089 = vunpack.c.l.b16 %v1050
    %v1090 = vunpack.c.l.b16 %v1051
    %v1091 = vunpack.c.l.b16 %v1052
    %v1092 = vunpack.c.l.b16 %v1053
    %v1093 = vunpack.c.l.b16 %v1054
    %v1094 = vunpack.c.l.b16 %v1055
    %v1095 = vunpack.c.l.b16 %v1056
    %v1096 = vunpack.c.l.b16 %v1057
    %v1097 = vunpack.c.l.b16 %v1058
    %v1098 = vpack.c.b16 %v1083, %v1082
    %v1099 = vpack.c.b16 %v1085, %v1084
    %v1100 = vpack.c.b16 %v1087, %v1086
    %v1101 = vpack.c.b16 %v1089, %v1088
    %v1102 = vpack.c.b16 %v1091, %v1090
    %v1103 = vpack.c.b16 %v1093, %v1092
    %v1104 = vpack.c.b16 %v1095, %v1094
    %v1105 = vpack.c.b16 %v1097, %v1096
    %1114 = vmatprep.subr.bf16.mxu0 0
    %1115 = vmatpush1.bf16.msra.mxu0 %v1098
    %1116 = vmatprep.subr.bf16.mxu0 0
    %1117 = vmatpush1.bf16.msra.mxu0 %v1099
    %1118 = vmatprep.subr.bf16.mxu0 0
    %1119 = vmatpush1.bf16.msra.mxu0 %v1100
    %1120 = vmatprep.subr.bf16.mxu0 0
    %1121 = vmatpush1.bf16.msra.mxu0 %v1101
    %1122 = vmatprep.subr.bf16.mxu0 0
    %1123 = vmatpush1.bf16.msra.mxu0 %v1102
    %1124 = vmatprep.subr.bf16.mxu0 0
    %1125 = vmatpush1.bf16.msra.mxu0 %v1103
    %1126 = vmatprep.subr.bf16.mxu0 0
    %1127 = vmatpush1.bf16.msra.mxu0 %v1104
    %1128 = vmatprep.subr.bf16.mxu0 0
    %1129 = vmatpush1.bf16.msra.mxu0 %v1105
    %1130 = vmatprep.subr.bf16.mxu0 0
    %1131 = vmatpush1.bf16.msra.mxu0 0
    %1132 = vmatprep.subr.bf16.mxu0 0
    %1133 = vmatpush1.bf16.msra.mxu0 0
    %1134 = vmatprep.subr.bf16.mxu0 0
    %1135 = vmatpush1.bf16.msra.mxu0 0
    %1136 = vmatprep.subr.bf16.mxu0 0
    %1137 = vmatpush1.bf16.msra.mxu0 0
    %1138 = vmatprep.subr.bf16.mxu0 0
    %1139 = vmatpush1.bf16.msra.mxu0 0
    %1140 = vmatprep.subr.bf16.mxu0 0
    %1141 = vmatpush1.bf16.msra.mxu0 0
    %1142 = vmatprep.subr.bf16.mxu0 0
    %1143 = vmatpush1.bf16.msra.mxu0 0
    %1144 = vmatprep.subr.bf16.mxu0 0
    %1145 = vmatpush1.bf16.msra.mxu0 0
    %1146 = vmatprep.mubr.bf16.mxu0 0
    %1147 = vmatmul.mubr.bf16.gmra.mrb[0].mxu0 %v1042
    %v1148 = vpop.f32.mrb[0].mxu0
    %v1149 = vadd.f32 %v1064, %v1148
    %v1150 = vpop.f32.mrb[0].mxu0
    %v1151 = vpop.f32.mrb[0].mxu0
    %v1152 = vpop.f32.mrb[0].mxu0
    %1153 = vdwg.mxu0
    %v1154 = vmax.f32 %v1149, 0.0
    %v1155 = vpack.c.bf16 %v1154, %v1154
    %v1156 = vld [vmem:[#allocation12] sm:$0xff]
    %v1157 = vld [vmem:[#allocation12 + $0x8] sm:$0xff]
    %v1158 = vld [vmem:[#allocation12 + $0x10] sm:$0xff]
    %v1159 = vld [vmem:[#allocation12 + $0x18] sm:$0xff]
    %v1160 = vld [vmem:[#allocation12 + $0x20] sm:$0xff]
    %v1161 = vld [vmem:[#allocation12 + $0x28] sm:$0xff]
    %v1162 = vld [vmem:[#allocation12 + $0x30] sm:$0xff]
    %v1163 = vld [vmem:[#allocation12 + $0x38] sm:$0xff]
    %v1164 = vld [vmem:[#allocation12 + $0x40] sm:$0xff]
    %v1165 = vld [vmem:[#allocation12 + $0x48] sm:$0xff]
    %v1166 = vld [vmem:[#allocation12 + $0x50] sm:$0xff]
    %v1167 = vld [vmem:[#allocation12 + $0x58] sm:$0xff]
    %v1168 = vld [vmem:[#allocation12 + $0x60] sm:$0xff]
    %v1169 = vld [vmem:[#allocation12 + $0x68] sm:$0xff]
    %v1170 = vld [vmem:[#allocation12 + $0x70] sm:$0xff]
    %v1171 = vld [vmem:[#allocation12 + $0x78] sm:$0xff]
    %v1172 = vld [vmem:[#allocation12 + $0x80] sm:$0xff]
    %v1173 = vld [vmem:[#allocation12 + $0x88] sm:$0xff]
    %v1174 = vld [vmem:[#allocation12 + $0x90] sm:$0xff]
    %v1175 = vld [vmem:[#allocation12 + $0x98] sm:$0xff]
    %v1176 = vld [vmem:[#allocation12 + $0xa0] sm:$0xff]
    %v1177 = vld [vmem:[#allocation12 + $0xa8] sm:$0xff]
    %v1178 = vld [vmem:[#allocation12 + $0xb0] sm:$0xff]
    %v1179 = vld [vmem:[#allocation12 + $0xb8] sm:$0xff]
    %v1180 = vld [vmem:[#allocation12 + $0xc0] sm:$0xff]
    %v1181 = vld [vmem:[#allocation12 + $0xc8] sm:$0xff]
    %v1182 = vld [vmem:[#allocation12 + $0xd0] sm:$0xff]
    %v1183 = vld [vmem:[#allocation12 + $0xd8] sm:$0xff]
    %v1184 = vld [vmem:[#allocation12 + $0xe0] sm:$0xff]
    %v1185 = vld [vmem:[#allocation12 + $0xe8] sm:$0xff]
    %v1186 = vld [vmem:[#allocation12 + $0xf0] sm:$0xff]
    %v1187 = vld [vmem:[#allocation12 + $0xf8] sm:$0xff]
    %v1188 = vld [vmem:[#allocation12 + $0x100] sm:$0xff]
    %v1189 = vld [vmem:[#allocation12 + $0x108] sm:$0xff]
    %v1190 = vld [vmem:[#allocation12 + $0x110] sm:$0xff]
    %v1191 = vld [vmem:[#allocation12 + $0x118] sm:$0xff]
    %v1192 = vld [vmem:[#allocation12 + $0x120] sm:$0xff]
    %v1193 = vld [vmem:[#allocation12 + $0x128] sm:$0xff]
    %v1194 = vld [vmem:[#allocation12 + $0x130] sm:$0xff]
    %v1195 = vld [vmem:[#allocation12 + $0x138] sm:$0xff]
    %v1196 = vld [vmem:[#allocation12 + $0x140] sm:$0xff]
    %v1197 = vld [vmem:[#allocation12 + $0x148] sm:$0xff]
    %v1198 = vld [vmem:[#allocation12 + $0x150] sm:$0xff]
    %v1199 = vld [vmem:[#allocation12 + $0x158] sm:$0xff]
    %v1200 = vld [vmem:[#allocation12 + $0x160] sm:$0xff]
    %v1201 = vld [vmem:[#allocation12 + $0x168] sm:$0xff]
    %v1202 = vld [vmem:[#allocation12 + $0x170] sm:$0xff]
    %v1203 = vld [vmem:[#allocation12 + $0x178] sm:$0xff]
    %v1204 = vld [vmem:[#allocation12 + $0x180] sm:$0xff]
    %v1205 = vld [vmem:[#allocation12 + $0x188] sm:$0xff]
    %v1206 = vld [vmem:[#allocation12 + $0x190] sm:$0xff]
    %v1207 = vld [vmem:[#allocation12 + $0x198] sm:$0xff]
    %v1208 = vld [vmem:[#allocation12 + $0x1a0] sm:$0xff]
    %v1209 = vld [vmem:[#allocation12 + $0x1a8] sm:$0xff]
    %v1210 = vld [vmem:[#allocation12 + $0x1b0] sm:$0xff]
    %v1211 = vld [vmem:[#allocation12 + $0x1b8] sm:$0xff]
    %v1212 = vld [vmem:[#allocation12 + $0x1c0] sm:$0xff]
    %v1213 = vld [vmem:[#allocation12 + $0x1c8] sm:$0xff]
    %v1214 = vld [vmem:[#allocation12 + $0x1d0] sm:$0xff]
    %v1215 = vld [vmem:[#allocation12 + $0x1d8] sm:$0xff]
    %v1216 = vld [vmem:[#allocation12 + $0x1e0] sm:$0xff]
    %v1217 = vld [vmem:[#allocation12 + $0x1e8] sm:$0xff]
    %v1218 = vld [vmem:[#allocation12 + $0x1f0] sm:$0xff]
    %v1219 = vld [vmem:[#allocation12 + $0x1f8] sm:$0xff]
    %v1220 = vld [vmem:[%s11] sm:$0xff]
    %v1222 = vlaneseq
    %v1223 = vshrl.u32 %v1222, 7
    %v1224 = vsub.s32 0, %v1223
    %v1225 = vrot.slane %v1220, %v1224
    %v1226 = vlaneseq
    %v1227 = vshrl.u32 %v1226, 7
    %v1228 = vsub.s32 1, %v1227
    %v1229 = vrot.slane %v1220, %v1228
    %v1230 = vlaneseq
    %v1231 = vshrl.u32 %v1230, 7
    %v1232 = vsub.s32 2, %v1231
    %v1233 = vrot.slane %v1220, %v1232
    %v1234 = vlaneseq
    %v1235 = vshrl.u32 %v1234, 7
    %v1236 = vsub.s32 3, %v1235
    %v1237 = vrot.slane %v1220, %v1236
    %v1238 = vlaneseq
    %v1239 = vshrl.u32 %v1238, 7
    %v1240 = vsub.s32 4, %v1239
    %v1241 = vrot.slane %v1220, %v1240
    %v1242 = vlaneseq
    %v1243 = vshrl.u32 %v1242, 7
    %v1244 = vsub.s32 5, %v1243
    %v1245 = vrot.slane %v1220, %v1244
    %v1246 = vlaneseq
    %v1247 = vshrl.u32 %v1246, 7
    %v1248 = vsub.s32 6, %v1247
    %v1249 = vrot.slane %v1220, %v1248
    %v1250 = vlaneseq
    %v1251 = vshrl.u32 %v1250, 7
    %v1252 = vsub.s32 7, %v1251
    %v1253 = vrot.slane %v1220, %v1252
    %v1326 = vunpack.c.l.b16 %v1156
    %v1327 = vunpack.c.h.b16 %v1156
    %v1328 = vunpack.c.l.b16 %v1157
    %v1329 = vunpack.c.h.b16 %v1157
    %v1330 = vunpack.c.l.b16 %v1158
    %v1331 = vunpack.c.h.b16 %v1158
    %v1332 = vunpack.c.l.b16 %v1159
    %v1333 = vunpack.c.h.b16 %v1159
    %v1334 = vunpack.c.l.b16 %v1160
    %v1335 = vunpack.c.h.b16 %v1160
    %v1336 = vunpack.c.l.b16 %v1161
    %v1337 = vunpack.c.h.b16 %v1161
    %v1338 = vunpack.c.l.b16 %v1162
    %v1339 = vunpack.c.h.b16 %v1162
    %v1340 = vunpack.c.l.b16 %v1163
    %v1341 = vunpack.c.h.b16 %v1163
    %v1342 = vunpack.c.l.b16 %v1164
    %v1343 = vunpack.c.h.b16 %v1164
    %v1344 = vunpack.c.l.b16 %v1165
    %v1345 = vunpack.c.h.b16 %v1165
    %v1346 = vunpack.c.l.b16 %v1166
    %v1347 = vunpack.c.h.b16 %v1166
    %v1348 = vunpack.c.l.b16 %v1167
    %v1349 = vunpack.c.h.b16 %v1167
    %v1350 = vunpack.c.l.b16 %v1168
    %v1351 = vunpack.c.h.b16 %v1168
    %v1352 = vunpack.c.l.b16 %v1169
    %v1353 = vunpack.c.h.b16 %v1169
    %v1354 = vunpack.c.l.b16 %v1170
    %v1355 = vunpack.c.h.b16 %v1170
    %v1356 = vunpack.c.l.b16 %v1171
    %v1357 = vunpack.c.h.b16 %v1171
    %v1358 = vunpack.c.l.b16 %v1172
    %v1359 = vunpack.c.h.b16 %v1172
    %v1360 = vunpack.c.l.b16 %v1173
    %v1361 = vunpack.c.h.b16 %v1173
    %v1362 = vunpack.c.l.b16 %v1174
    %v1363 = vunpack.c.h.b16 %v1174
    %v1364 = vunpack.c.l.b16 %v1175
    %v1365 = vunpack.c.h.b16 %v1175
    %v1366 = vunpack.c.l.b16 %v1176
    %v1367 = vunpack.c.h.b16 %v1176
    %v1368 = vunpack.c.l.b16 %v1177
    %v1369 = vunpack.c.h.b16 %v1177
    %v1370 = vunpack.c.l.b16 %v1178
    %v1371 = vunpack.c.h.b16 %v1178
    %v1372 = vunpack.c.l.b16 %v1179
    %v1373 = vunpack.c.h.b16 %v1179
    %v1374 = vunpack.c.l.b16 %v1180
    %v1375 = vunpack.c.h.b16 %v1180
    %v1376 = vunpack.c.l.b16 %v1181
    %v1377 = vunpack.c.h.b16 %v1181
    %v1378 = vunpack.c.l.b16 %v1182
    %v1379 = vunpack.c.h.b16 %v1182
    %v1380 = vunpack.c.l.b16 %v1183
    %v1381 = vunpack.c.h.b16 %v1183
    %v1382 = vunpack.c.l.b16 %v1184
    %v1383 = vunpack.c.h.b16 %v1184
    %v1384 = vunpack.c.l.b16 %v1185
    %v1385 = vunpack.c.h.b16 %v1185
    %v1386 = vunpack.c.l.b16 %v1186
    %v1387 = vunpack.c.h.b16 %v1186
    %v1388 = vunpack.c.l.b16 %v1187
    %v1389 = vunpack.c.h.b16 %v1187
    %v1390 = vunpack.c.l.b16 %v1188
    %v1391 = vunpack.c.h.b16 %v1188
    %v1392 = vunpack.c.l.b16 %v1189
    %v1393 = vunpack.c.h.b16 %v1189
    %v1394 = vunpack.c.l.b16 %v1190
    %v1395 = vunpack.c.h.b16 %v1190
    %v1396 = vunpack.c.l.b16 %v1191
    %v1397 = vunpack.c.h.b16 %v1191
    %v1398 = vunpack.c.l.b16 %v1192
    %v1399 = vunpack.c.h.b16 %v1192
    %v1400 = vunpack.c.l.b16 %v1193
    %v1401 = vunpack.c.h.b16 %v1193
    %v1402 = vunpack.c.l.b16 %v1194
    %v1403 = vunpack.c.h.b16 %v1194
    %v1404 = vunpack.c.l.b16 %v1195
    %v1405 = vunpack.c.h.b16 %v1195
    %v1406 = vunpack.c.l.b16 %v1196
    %v1407 = vunpack.c.h.b16 %v1196
    %v1408 = vunpack.c.l.b16 %v1197
    %v1409 = vunpack.c.h.b16 %v1197
    %v1410 = vunpack.c.l.b16 %v1198
    %v1411 = vunpack.c.h.b16 %v1198
    %v1412 = vunpack.c.l.b16 %v1199
    %v1413 = vunpack.c.h.b16 %v1199
    %v1414 = vunpack.c.l.b16 %v1200
    %v1415 = vunpack.c.h.b16 %v1200
    %v1416 = vunpack.c.l.b16 %v1201
    %v1417 = vunpack.c.h.b16 %v1201
    %v1418 = vunpack.c.l.b16 %v1202
    %v1419 = vunpack.c.h.b16 %v1202
    %v1420 = vunpack.c.l.b16 %v1203
    %v1421 = vunpack.c.h.b16 %v1203
    %v1422 = vunpack.c.l.b16 %v1204
    %v1423 = vunpack.c.h.b16 %v1204
    %v1424 = vunpack.c.l.b16 %v1205
    %v1425 = vunpack.c.h.b16 %v1205
    %v1426 = vunpack.c.l.b16 %v1206
    %v1427 = vunpack.c.h.b16 %v1206
    %v1428 = vunpack.c.l.b16 %v1207
    %v1429 = vunpack.c.h.b16 %v1207
    %v1430 = vunpack.c.l.b16 %v1208
    %v1431 = vunpack.c.h.b16 %v1208
    %v1432 = vunpack.c.l.b16 %v1209
    %v1433 = vunpack.c.h.b16 %v1209
    %v1434 = vunpack.c.l.b16 %v1210
    %v1435 = vunpack.c.h.b16 %v1210
    %v1436 = vunpack.c.l.b16 %v1211
    %v1437 = vunpack.c.h.b16 %v1211
    %v1438 = vunpack.c.l.b16 %v1212
    %v1439 = vunpack.c.h.b16 %v1212
    %v1440 = vunpack.c.l.b16 %v1213
    %v1441 = vunpack.c.h.b16 %v1213
    %v1442 = vunpack.c.l.b16 %v1214
    %v1443 = vunpack.c.h.b16 %v1214
    %v1444 = vunpack.c.l.b16 %v1215
    %v1445 = vunpack.c.h.b16 %v1215
    %v1446 = vunpack.c.l.b16 %v1216
    %v1447 = vunpack.c.h.b16 %v1216
    %v1448 = vunpack.c.l.b16 %v1217
    %v1449 = vunpack.c.h.b16 %v1217
    %v1450 = vunpack.c.l.b16 %v1218
    %v1451 = vunpack.c.h.b16 %v1218
    %v1452 = vunpack.c.l.b16 %v1219
    %v1453 = vunpack.c.h.b16 %v1219
    %v1454 = vpack.c.b16 %v1334, %v1326
    %v1455 = vpack.c.b16 %v1335, %v1327
    %v1456 = vpack.c.b16 %v1336, %v1328
    %v1457 = vpack.c.b16 %v1337, %v1329
    %v1458 = vpack.c.b16 %v1338, %v1330
    %v1459 = vpack.c.b16 %v1339, %v1331
    %v1460 = vpack.c.b16 %v1340, %v1332
    %v1461 = vpack.c.b16 %v1341, %v1333
    %v1462 = vpack.c.b16 %v1350, %v1342
    %v1463 = vpack.c.b16 %v1351, %v1343
    %v1464 = vpack.c.b16 %v1352, %v1344
    %v1465 = vpack.c.b16 %v1353, %v1345
    %v1466 = vpack.c.b16 %v1354, %v1346
    %v1467 = vpack.c.b16 %v1355, %v1347
    %v1468 = vpack.c.b16 %v1356, %v1348
    %v1469 = vpack.c.b16 %v1357, %v1349
    %v1470 = vpack.c.b16 %v1366, %v1358
    %v1471 = vpack.c.b16 %v1367, %v1359
    %v1472 = vpack.c.b16 %v1368, %v1360
    %v1473 = vpack.c.b16 %v1369, %v1361
    %v1474 = vpack.c.b16 %v1370, %v1362
    %v1475 = vpack.c.b16 %v1371, %v1363
    %v1476 = vpack.c.b16 %v1372, %v1364
    %v1477 = vpack.c.b16 %v1373, %v1365
    %v1478 = vpack.c.b16 %v1382, %v1374
    %v1479 = vpack.c.b16 %v1383, %v1375
    %v1480 = vpack.c.b16 %v1384, %v1376
    %v1481 = vpack.c.b16 %v1385, %v1377
    %v1482 = vpack.c.b16 %v1386, %v1378
    %v1483 = vpack.c.b16 %v1387, %v1379
    %v1484 = vpack.c.b16 %v1388, %v1380
    %v1485 = vpack.c.b16 %v1389, %v1381
    %v1486 = vpack.c.b16 %v1398, %v1390
    %v1487 = vpack.c.b16 %v1399, %v1391
    %v1488 = vpack.c.b16 %v1400, %v1392
    %v1489 = vpack.c.b16 %v1401, %v1393
    %v1490 = vpack.c.b16 %v1402, %v1394
    %v1491 = vpack.c.b16 %v1403, %v1395
    %v1492 = vpack.c.b16 %v1404, %v1396
    %v1493 = vpack.c.b16 %v1405, %v1397
    %v1494 = vpack.c.b16 %v1414, %v1406
    %v1495 = vpack.c.b16 %v1415, %v1407
    %v1496 = vpack.c.b16 %v1416, %v1408
    %v1497 = vpack.c.b16 %v1417, %v1409
    %v1498 = vpack.c.b16 %v1418, %v1410
    %v1499 = vpack.c.b16 %v1419, %v1411
    %v1500 = vpack.c.b16 %v1420, %v1412
    %v1501 = vpack.c.b16 %v1421, %v1413
    %v1502 = vpack.c.b16 %v1430, %v1422
    %v1503 = vpack.c.b16 %v1431, %v1423
    %v1504 = vpack.c.b16 %v1432, %v1424
    %v1505 = vpack.c.b16 %v1433, %v1425
    %v1506 = vpack.c.b16 %v1434, %v1426
    %v1507 = vpack.c.b16 %v1435, %v1427
    %v1508 = vpack.c.b16 %v1436, %v1428
    %v1509 = vpack.c.b16 %v1437, %v1429
    %v1510 = vpack.c.b16 %v1446, %v1438
    %v1511 = vpack.c.b16 %v1447, %v1439
    %v1512 = vpack.c.b16 %v1448, %v1440
    %v1513 = vpack.c.b16 %v1449, %v1441
    %v1514 = vpack.c.b16 %v1450, %v1442
    %v1515 = vpack.c.b16 %v1451, %v1443
    %v1516 = vpack.c.b16 %v1452, %v1444
    %v1517 = vpack.c.b16 %v1453, %v1445
    %1582 = vmatprep.subr.bf16.mxu0 %v1455
    %1583 = vmatpush1.bf16.msra.mxu0 %v1454
    %1584 = vmatprep.subr.bf16.mxu0 %v1463
    %1585 = vmatpush1.bf16.msra.mxu0 %v1462
    %1586 = vmatprep.subr.bf16.mxu0 %v1471
    %1587 = vmatpush1.bf16.msra.mxu0 %v1470
    %1588 = vmatprep.subr.bf16.mxu0 %v1479
    %1589 = vmatpush1.bf16.msra.mxu0 %v1478
    %1590 = vmatprep.subr.bf16.mxu0 %v1487
    %1591 = vmatpush1.bf16.msra.mxu0 %v1486
    %1592 = vmatprep.subr.bf16.mxu0 %v1495
    %1593 = vmatpush1.bf16.msra.mxu0 %v1494
    %1594 = vmatprep.subr.bf16.mxu0 %v1503
    %1595 = vmatpush1.bf16.msra.mxu0 %v1502
    %1596 = vmatprep.subr.bf16.mxu0 %v1511
    %1597 = vmatpush1.bf16.msra.mxu0 %v1510
    %1598 = vmatprep.subr.bf16.mxu0 0
    %1599 = vmatpush1.bf16.msra.mxu0 0
    %1600 = vmatprep.subr.bf16.mxu0 0
    %1601 = vmatpush1.bf16.msra.mxu0 0
    %1602 = vmatprep.subr.bf16.mxu0 0
    %1603 = vmatpush1.bf16.msra.mxu0 0
    %1604 = vmatprep.subr.bf16.mxu0 0
    %1605 = vmatpush1.bf16.msra.mxu0 0
    %1606 = vmatprep.subr.bf16.mxu0 0
    %1607 = vmatpush1.bf16.msra.mxu0 0
    %1608 = vmatprep.subr.bf16.mxu0 0
    %1609 = vmatpush1.bf16.msra.mxu0 0
    %1610 = vmatprep.subr.bf16.mxu0 0
    %1611 = vmatpush1.bf16.msra.mxu0 0
    %1612 = vmatprep.subr.bf16.mxu0 0
    %1613 = vmatpush1.bf16.msra.mxu0 0
    %1614 = vmatprep.mubr.bf16.mxu0 0
    %1615 = vmatmul.mubr.bf16.gmra.mrb[0].mxu0 %v1155
    %v1616 = vpop.f32.mrb[0].mxu0
    %v1617 = vadd.f32 %v1225, %v1616
    %v1618 = vpop.f32.mrb[0].mxu0
    %v1619 = vadd.f32 %v1229, %v1618
    %v1620 = vpop.f32.mrb[0].mxu0
    %v1621 = vpop.f32.mrb[0].mxu0
    %1622 = vdwg.mxu0
    %1623 = vmatprep.subr.bf16.mxu0 %v1457
    %1624 = vmatpush1.bf16.msra.mxu0 %v1456
    %1625 = vmatprep.subr.bf16.mxu0 %v1465
    %1626 = vmatpush1.bf16.msra.mxu0 %v1464
    %1627 = vmatprep.subr.bf16.mxu0 %v1473
    %1628 = vmatpush1.bf16.msra.mxu0 %v1472
    %1629 = vmatprep.subr.bf16.mxu0 %v1481
    %1630 = vmatpush1.bf16.msra.mxu0 %v1480
    %1631 = vmatprep.subr.bf16.mxu0 %v1489
    %1632 = vmatpush1.bf16.msra.mxu0 %v1488
    %1633 = vmatprep.subr.bf16.mxu0 %v1497
    %1634 = vmatpush1.bf16.msra.mxu0 %v1496
    %1635 = vmatprep.subr.bf16.mxu0 %v1505
    %1636 = vmatpush1.bf16.msra.mxu0 %v1504
    %1637 = vmatprep.subr.bf16.mxu0 %v1513
    %1638 = vmatpush1.bf16.msra.mxu0 %v1512
    %1639 = vmatprep.subr.bf16.mxu0 0
    %1640 = vmatpush1.bf16.msra.mxu0 0
    %1641 = vmatprep.subr.bf16.mxu0 0
    %1642 = vmatpush1.bf16.msra.mxu0 0
    %1643 = vmatprep.subr.bf16.mxu0 0
    %1644 = vmatpush1.bf16.msra.mxu0 0
    %1645 = vmatprep.subr.bf16.mxu0 0
    %1646 = vmatpush1.bf16.msra.mxu0 0
    %1647 = vmatprep.subr.bf16.mxu0 0
    %1648 = vmatpush1.bf16.msra.mxu0 0
    %1649 = vmatprep.subr.bf16.mxu0 0
    %1650 = vmatpush1.bf16.msra.mxu0 0
    %1651 = vmatprep.subr.bf16.mxu0 0
    %1652 = vmatpush1.bf16.msra.mxu0 0
    %1653 = vmatprep.subr.bf16.mxu0 0
    %1654 = vmatpush1.bf16.msra.mxu0 0
    %1655 = vmatprep.mubr.bf16.mxu0 0
    %1656 = vmatmul.mubr.bf16.gmra.mrb[0].mxu0 %v1155
    %v1657 = vpop.f32.mrb[0].mxu0
    %v1658 = vadd.f32 %v1233, %v1657
    %v1659 = vpop.f32.mrb[0].mxu0
    %v1660 = vadd.f32 %v1237, %v1659
    %v1661 = vpop.f32.mrb[0].mxu0
    %v1662 = vpop.f32.mrb[0].mxu0
    %1663 = vdwg.mxu0
    %1664 = vmatprep.subr.bf16.mxu0 %v1459
    %1665 = vmatpush1.bf16.msra.mxu0 %v1458
    %1666 = vmatprep.subr.bf16.mxu0 %v1467
    %1667 = vmatpush1.bf16.msra.mxu0 %v1466
    %1668 = vmatprep.subr.bf16.mxu0 %v1475
    %1669 = vmatpush1.bf16.msra.mxu0 %v1474
    %1670 = vmatprep.subr.bf16.mxu0 %v1483
    %1671 = vmatpush1.bf16.msra.mxu0 %v1482
    %1672 = vmatprep.subr.bf16.mxu0 %v1491
    %1673 = vmatpush1.bf16.msra.mxu0 %v1490
    %1674 = vmatprep.subr.bf16.mxu0 %v1499
    %1675 = vmatpush1.bf16.msra.mxu0 %v1498
    %1676 = vmatprep.subr.bf16.mxu0 %v1507
    %1677 = vmatpush1.bf16.msra.mxu0 %v1506
    %1678 = vmatprep.subr.bf16.mxu0 %v1515
    %1679 = vmatpush1.bf16.msra.mxu0 %v1514
    %1680 = vmatprep.subr.bf16.mxu0 0
    %1681 = vmatpush1.bf16.msra.mxu0 0
    %1682 = vmatprep.subr.bf16.mxu0 0
    %1683 = vmatpush1.bf16.msra.mxu0 0
    %1684 = vmatprep.subr.bf16.mxu0 0
    %1685 = vmatpush1.bf16.msra.mxu0 0
    %1686 = vmatprep.subr.bf16.mxu0 0
    %1687 = vmatpush1.bf16.msra.mxu0 0
    %1688 = vmatprep.subr.bf16.mxu0 0
    %1689 = vmatpush1.bf16.msra.mxu0 0
    %1690 = vmatprep.subr.bf16.mxu0 0
    %1691 = vmatpush1.bf16.msra.mxu0 0
    %1692 = vmatprep.subr.bf16.mxu0 0
    %1693 = vmatpush1.bf16.msra.mxu0 0
    %1694 = vmatprep.subr.bf16.mxu0 0
    %1695 = vmatpush1.bf16.msra.mxu0 0
    %1696 = vmatprep.mubr.bf16.mxu0 0
    %1697 = vmatmul.mubr.bf16.gmra.mrb[0].mxu0 %v1155
    %v1698 = vpop.f32.mrb[0].mxu0
    %v1699 = vadd.f32 %v1241, %v1698
    %v1700 = vpop.f32.mrb[0].mxu0
    %v1701 = vadd.f32 %v1245, %v1700
    %v1702 = vpop.f32.mrb[0].mxu0
    %v1703 = vpop.f32.mrb[0].mxu0
    %1704 = vdwg.mxu0
    %1705 = vmatprep.subr.bf16.mxu0 %v1461
    %1706 = vmatpush1.bf16.msra.mxu0 %v1460
    %1707 = vmatprep.subr.bf16.mxu0 %v1469
    %1708 = vmatpush1.bf16.msra.mxu0 %v1468
    %1709 = vmatprep.subr.bf16.mxu0 %v1477
    %1710 = vmatpush1.bf16.msra.mxu0 %v1476
    %1711 = vmatprep.subr.bf16.mxu0 %v1485
    %1712 = vmatpush1.bf16.msra.mxu0 %v1484
    %1713 = vmatprep.subr.bf16.mxu0 %v1493
    %1714 = vmatpush1.bf16.msra.mxu0 %v1492
    %1715 = vmatprep.subr.bf16.mxu0 %v1501
    %1716 = vmatpush1.bf16.msra.mxu0 %v1500
    %1717 = vmatprep.subr.bf16.mxu0 %v1509
    %1718 = vmatpush1.bf16.msra.mxu0 %v1508
    %1719 = vmatprep.subr.bf16.mxu0 %v1517
    %1720 = vmatpush1.bf16.msra.mxu0 %v1516
    %1721 = vmatprep.subr.bf16.mxu0 0
    %1722 = vmatpush1.bf16.msra.mxu0 0
    %1723 = vmatprep.subr.bf16.mxu0 0
    %1724 = vmatpush1.bf16.msra.mxu0 0
    %1725 = vmatprep.subr.bf16.mxu0 0
    %1726 = vmatpush1.bf16.msra.mxu0 0
    %1727 = vmatprep.subr.bf16.mxu0 0
    %1728 = vmatpush1.bf16.msra.mxu0 0
    %1729 = vmatprep.subr.bf16.mxu0 0
    %1730 = vmatpush1.bf16.msra.mxu0 0
    %1731 = vmatprep.subr.bf16.mxu0 0
    %1732 = vmatpush1.bf16.msra.mxu0 0
    %1733 = vmatprep.subr.bf16.mxu0 0
    %1734 = vmatpush1.bf16.msra.mxu0 0
    %1735 = vmatprep.subr.bf16.mxu0 0
    %1736 = vmatpush1.bf16.msra.mxu0 0
    %1737 = vmatprep.mubr.bf16.mxu0 0
    %1738 = vmatmul.mubr.bf16.gmra.mrb[0].mxu0 %v1155
    %v1739 = vpop.f32.mrb[0].mxu0
    %v1740 = vadd.f32 %v1249, %v1739
    %v1741 = vpop.f32.mrb[0].mxu0
    %v1742 = vadd.f32 %v1253, %v1741
    %v1743 = vpop.f32.mrb[0].mxu0
    %v1744 = vpop.f32.mrb[0].mxu0
    %1745 = vdwg.mxu0
    %v1746 = vxor.u32 %v1617, 2147483648
    %v1747 = vxor.u32 %v1619, 2147483648
    %v1748 = vxor.u32 %v1658, 2147483648
    %v1749 = vxor.u32 %v1660, 2147483648
    %v1750 = vxor.u32 %v1699, 2147483648
    %v1751 = vxor.u32 %v1701, 2147483648
    %v1752 = vxor.u32 %v1740, 2147483648
    %v1753 = vxor.u32 %v1742, 2147483648
    %v1754 = vmul.f32 %v1746, 1.442695
    %v1755 = vpow.pop %v1754
    %v1756 = vmul.f32 %v1747, 1.442695
    %v1757 = vpow.pop %v1756
    %v1758 = vmul.f32 %v1748, 1.442695
    %v1759 = vpow.pop %v1758
    %v1760 = vmul.f32 %v1749, 1.442695
    %v1761 = vpow.pop %v1760
    %v1762 = vmul.f32 %v1750, 1.442695
    %v1763 = vpow.pop %v1762
    %v1764 = vmul.f32 %v1751, 1.442695
    %v1765 = vpow.pop %v1764
    %v1766 = vmul.f32 %v1752, 1.442695
    %v1767 = vpow.pop %v1766
    %v1768 = vmul.f32 %v1753, 1.442695
    %v1769 = vpow.pop %v1768
    %v1770 = vadd.f32 %v1755, 1.0
    %v1771 = vadd.f32 %v1757, 1.0
    %v1772 = vadd.f32 %v1759, 1.0
    %v1773 = vadd.f32 %v1761, 1.0
    %v1774 = vadd.f32 %v1763, 1.0
    %v1775 = vadd.f32 %v1765, 1.0
    %v1776 = vadd.f32 %v1767, 1.0
    %v1777 = vadd.f32 %v1769, 1.0
    %v1778 = vrcp.pop %v1770
    %v1779 = vmul.f32 1.0, %v1778
    %v1780 = vrcp.pop %v1771
    %v1781 = vmul.f32 1.0, %v1780
    %v1782 = vrcp.pop %v1772
    %v1783 = vmul.f32 1.0, %v1782
    %v1784 = vrcp.pop %v1773
    %v1785 = vmul.f32 1.0, %v1784
    %v1786 = vrcp.pop %v1774
    %v1787 = vmul.f32 1.0, %v1786
    %v1788 = vrcp.pop %v1775
    %v1789 = vmul.f32 1.0, %v1788
    %v1790 = vrcp.pop %v1776
    %v1791 = vmul.f32 1.0, %v1790
    %v1792 = vrcp.pop %v1777
    %v1793 = vmul.f32 1.0, %v1792
    %v1794 = vpack.c.bf16 %v1779, %v1779
    %v1795 = vpack.c.bf16 %v1781, %v1781
    %v1796 = vpack.c.bf16 %v1783, %v1783
    %v1797 = vpack.c.bf16 %v1785, %v1785
    %v1798 = vpack.c.bf16 %v1787, %v1787
    %v1799 = vpack.c.bf16 %v1789, %v1789
    %v1800 = vpack.c.bf16 %v1791, %v1791
    %v1801 = vpack.c.bf16 %v1793, %v1793
    %v1810 = vunpack.c.l.b16 %v1794
    %v1811 = vunpack.c.l.b16 %v1795
    %v1812 = vunpack.c.l.b16 %v1796
    %v1813 = vunpack.c.l.b16 %v1797
    %v1814 = vunpack.c.l.b16 %v1798
    %v1815 = vunpack.c.l.b16 %v1799
    %v1816 = vunpack.c.l.b16 %v1800
    %v1817 = vunpack.c.l.b16 %v1801
    %v1818 = vpack.c.b16 %v1811, %v1810
    %v1819 = vpack.c.b16 %v1813, %v1812
    %v1820 = vpack.c.b16 %v1815, %v1814
    %v1821 = vpack.c.b16 %v1817, %v1816
    %1826 = vst [vmem:[#allocation14] sm:$0xff] %v1818
    %1827 = vst [vmem:[#allocation14 + $0x8] sm:$0xff] %v1819
    %1828 = vst [vmem:[#allocation14 + $0x10] sm:$0xff] %v1820
    %1829 = vst [vmem:[#allocation14 + $0x18] sm:$0xff] %v1821
    // Predicated region
    $region74: #{tpu_custom_call.1} parent=1 // pred_check
      _
    $region75: #{tpu_custom_call.1} parent=1 // pred_check_branch
      %1831 = sbr.rel (0) target = $region77
    $region76: #{tpu_custom_call.1} parent=1 // pred_region
      %s1833 = ssub.s32 512, 512
      %1834 = vsyncadd [#allocation5], %s1833
      %s1836 = sshll.u32 [#allocation14], 4
      %s1837 = int_to_ptr.vmem [resolvable:$true] %s1836
      %1839 = dma.vmem_to_hbm [thread:$0]  %s1837, 512, %s12, [#allocation5]
    $region77: #{tpu_custom_call.1} parent=1 // pred_fallthru
      _
    // Predicated region
    $region78: #{tpu_custom_call.1} parent=1 // pred_check
      _
    $region79: #{tpu_custom_call.1} parent=1 // pred_check_branch
      %1841 = sbr.rel (0) target = $region81
    $region80: #{tpu_custom_call.1} parent=1 // pred_region
      %s1843 = ssub.s32 384, 384
      %1844 = vsyncadd [#allocation16], %s1843
      %s1846 = sshll.u32 [#allocation15], 4
      %s1847 = int_to_ptr.vmem [resolvable:$true] %s1846
      %1849 = dma.vmem_to_hbm [thread:$0]  %s1847, 384, %s13, [#allocation16]
    $region81: #{tpu_custom_call.1} parent=1 // pred_fallthru
      _
    // Predicated region
    $region82: #{tpu_custom_call.1} parent=1 // pred_check
      _
    $region83: #{tpu_custom_call.1} parent=1 // pred_check_branch
      %1851 = sbr.rel (0) target = $region85
    $region84: #{tpu_custom_call.1} parent=1 // pred_region
      %1852 = dma.done [#allocation5], 512
    $region85: #{tpu_custom_call.1} parent=1 // pred_fallthru
      _
    // Predicated region
    $region86: #{tpu_custom_call.1} parent=1 // pred_check
      _
    $region87: #{tpu_custom_call.1} parent=1 // pred_check_branch
      %1854 = sbr.rel (0) target = $region89
    $region88: #{tpu_custom_call.1} parent=1 // pred_region
      %1855 = dma.done [#allocation16], 384
    $region89: #{tpu_custom_call.1} parent=1 // pred_fallthru
      _
    %1856 = vsyncpa [#allocation4], 1
    %1857 = vsyncpa [#allocation7], 1
    %1858 = vsyncpa [#allocation10], 1
    %1859 = vsyncpa [#allocation13], 1
    %1860 = vsyncpa [#allocation5], 1
    %1861 = vsyncpa [#allocation16], 1

</llo_original>
